<compile_context>
chip_gen: v7x
topology: tpu7x:2x2x1
jax: 0.10.0
libtpu: 0.0.40
codegen_flags: <defaults>
</compile_context>

<pallas_src>
import functools
import math

import jax
import jax.numpy as jnp
from jax.experimental import pallas as pl
from jax.experimental.pallas import tpu as pltpu


def _round_up(x, m):
    return ((x + m - 1) // m) * m


def _pad2(a, rows, cols):
    r, c = a.shape
    if r == rows and c == cols:
        return a
    return jnp.pad(a, ((0, rows - r), (0, cols - c)))


def csrae_fwd_kernel(x_ref, eps_ref,
                     w1e_ref, b1e_ref,
                     whead_ref, bhead_ref,
                     w1d_ref, b1d_ref,
                     wout_ref, bout_ref,
                     out_ref, *, d_pad, l_pad):
    # Encoder hidden: h = relu(x @ W1e + b1e)   (bf16 MXU, f32 accumulate)
    h = jnp.dot(x_ref[...], w1e_ref[...], preferred_element_type=jnp.float32)
    h = jnp.maximum(h + b1e_ref[...], 0.0)

    # Fused mu|logvar head: one (H_pad, 2*L_pad) matmul.
    head = jnp.dot(h.astype(jnp.bfloat16), whead_ref[...],
                   preferred_element_type=jnp.float32) + bhead_ref[...]

    # 128-lane-aligned split (free views).
    mu = head[:, :l_pad]
    logvar = head[:, l_pad:]

    # Reparameterize: z = mu + eps * exp(0.5 * logvar)   (f32; exp -> EUP)
    z = mu + eps_ref[...] * jnp.exp(0.5 * logvar)

    # Decoder hidden: hd = relu(z @ W1d + b1d)
    hd = jnp.dot(z.astype(jnp.bfloat16), w1d_ref[...],
                 preferred_element_type=jnp.float32)
    hd = jnp.maximum(hd + b1d_ref[...], 0.0)

    # Bernoulli logits
    logits = jnp.dot(hd.astype(jnp.bfloat16), wout_ref[...],
                     preferred_element_type=jnp.float32) + bout_ref[...]

    # Single lane-dense output slab: [logits | mu | logvar].
    out_ref[:, :d_pad] = logits
    out_ref[:, d_pad:] = head


def mixture_csrae_forward(x, eps, params, *, batch_tile=None):
    """Fused Pallas forward.  x: (B, D_in) f32, eps: (B, L) f32."""
    B, D_in = x.shape
    L = eps.shape[1]
    H = params["w1e"].shape[1]

    # Lane-dense feature padding.
    D_pad = _round_up(D_in, 128)
    H_pad = _round_up(H, 128)
    L_pad = _round_up(L, 128)
    OUT_W = D_pad + 2 * L_pad

    # Batch tile: multiple of 16, <=512 rows/step, minimal padding, and >=2
    # grid steps for large batches (v7x megacore sharding via "parallel").
    if batch_tile is None:
        min_steps = 2 if B >= 128 else 1
        n_steps = max(min_steps, -(-B // 512))
        batch_tile = _round_up(-(-B // n_steps), 16)
    batch_tile = max(16, _round_up(batch_tile, 16))
    B_pad = _round_up(B, batch_tile)
    grid = (B_pad // batch_tile,)

    # Activations: x streamed in bf16, eps stays f32; zero-padded to tiles.
    x_p = jnp.zeros((B_pad, D_pad), jnp.bfloat16).at[:B, :D_in].set(
        x.astype(jnp.bfloat16))
    eps_p = jnp.zeros((B_pad, L_pad), jnp.float32).at[:B, :L].set(
        eps.astype(jnp.float32))

    # Weights: bf16, zero-padded once; fused [mu | logvar] head; f32 biases.
    w1e = _pad2(params["w1e"], D_pad, H_pad).astype(jnp.bfloat16)
    whead = jnp.concatenate(
        [_pad2(params["wmu"], H_pad, L_pad),
         _pad2(params["wlv"], H_pad, L_pad)], axis=1).astype(jnp.bfloat16)
    w1d = _pad2(params["w1d"], L_pad, H_pad).astype(jnp.bfloat16)
    wout = _pad2(params["wout"], H_pad, D_pad).astype(jnp.bfloat16)
    b1e = _pad2(params["b1e"].astype(jnp.float32), 1, H_pad)
    bhead = jnp.concatenate(
        [_pad2(params["bmu"].astype(jnp.float32), 1, L_pad),
         _pad2(params["blv"].astype(jnp.float32), 1, L_pad)], axis=1)
    b1d = _pad2(params["b1d"].astype(jnp.float32), 1, H_pad)
    bout = _pad2(params["bout"].astype(jnp.float32), 1, D_pad)

    # Advisory cost estimate.
    w_elems = D_pad * H_pad + H_pad * 2 * L_pad + L_pad * H_pad + H_pad * D_pad
    weight_bytes = 2 * w_elems + 4 * (2 * H_pad + 2 * L_pad + D_pad)
    flops = 2 * B_pad * w_elems
    act_bytes = 2 * B_pad * D_pad + 4 * B_pad * L_pad + 4 * B_pad * OUT_W
    cost = pl.CostEstimate(flops=flops, transcendentals=B_pad * L_pad,
                           bytes_accessed=weight_bytes + act_bytes)

    # VMEM budget: resident (single-buffered) weights + double-buffered
    # per-step activation tiles + slack; clamped under v7x's 64 MiB physical.
    tile_act_bytes = (2 * batch_tile * D_pad        # x tile (bf16)
                      + 4 * batch_tile * L_pad      # eps tile (f32)
                      + 4 * batch_tile * OUT_W)     # output slab (f32)
    vmem_bytes = int(min(max(weight_bytes + 2 * tile_act_bytes + (8 << 20),
                             16 << 20), 56 << 20))

    act_spec = lambda d: pl.BlockSpec((batch_tile, d), lambda i: (i, 0))

    def build_and_call(single_buffer_weights):
        if single_buffer_weights:
            rep_spec = lambda r, c: pl.BlockSpec(
                (r, c), lambda i: (0, 0), pipeline_mode=pl.Buffered(1))
        else:
            rep_spec = lambda r, c: pl.BlockSpec((r, c), lambda i: (0, 0))

        in_specs = [
            act_spec(D_pad),            # x
            act_spec(L_pad),            # eps
            rep_spec(D_pad, H_pad),     # w1e   (bf16)
            rep_spec(1, H_pad),         # b1e
            rep_spec(H_pad, 2 * L_pad),  # whead (bf16, mu|logvar fused)
            rep_spec(1, 2 * L_pad),     # bhead
            rep_spec(L_pad, H_pad),     # w1d   (bf16)
            rep_spec(1, H_pad),         # b1d
            rep_spec(H_pad, D_pad),     # wout  (bf16)
            rep_spec(1, D_pad),         # bout
        ]
        return pl.pallas_call(
            functools.partial(csrae_fwd_kernel, d_pad=D_pad, l_pad=L_pad),
            grid=grid,
            in_specs=in_specs,
            out_specs=act_spec(OUT_W),
            out_shape=jax.ShapeDtypeStruct((B_pad, OUT_W), jnp.float32),
            compiler_params=pltpu.CompilerParams(
                dimension_semantics=("parallel",),
                vmem_limit_bytes=vmem_bytes),
            cost_estimate=cost,
        )(x_p, eps_p, w1e, b1e, whead, bhead, w1d, b1d, wout, bout)

    try:
        out = build_and_call(True)
    except Exception:
        # Fallback if pipeline_mode=pl.Buffered(1) is unsupported in this
        # JAX build; weights are then (redundantly) double-buffered.
        out = build_and_call(False)

    # Free layout plumbing: strip padding, split the output slab.
    logits = out[:B, :D_in]
    mu = out[:B, D_pad:D_pad + L]
    logvar = out[:B, D_pad + L_pad:D_pad + L_pad + L]
    return logits, mu, logvar


def init_params(key, input_dim, hidden_dim, latent_dim):
    """Deterministic synthetic parameters (PyTorch-Linear-like uniform init),
    stored as (in, out) matrices so the kernel computes x @ W + b."""
    ks = jax.random.split(key, 10)

    def lin(kw, kb, d_in, d_out):
        bound = 1.0 / math.sqrt(d_in)
        w = jax.random.uniform(kw, (d_in, d_out), jnp.float32, -bound, bound)
        b = jax.random.uniform(kb, (1, d_out), jnp.float32, -bound, bound)
        return w, b

    p = {}
    p["w1e"], p["b1e"] = lin(ks[0], ks[1], input_dim, hidden_dim)
    p["wmu"], p["bmu"] = lin(ks[2], ks[3], hidden_dim, latent_dim)
    p["wlv"], p["blv"] = lin(ks[4], ks[5], hidden_dim, latent_dim)
    p["w1d"], p["b1d"] = lin(ks[6], ks[7], latent_dim, hidden_dim)
    p["wout"], p["bout"] = lin(ks[8], ks[9], hidden_dim, input_dim)
    return p


def reference_forward(x, eps, p):
    """Pure-JAX f32 reference of MixtureCSRAE.forward for verification."""
    h = jnp.maximum(x @ p["w1e"] + p["b1e"], 0.0)
    mu = h @ p["wmu"] + p["bmu"]
    logvar = h @ p["wlv"] + p["blv"]
    z = mu + eps * jnp.exp(0.5 * logvar)
    hd = jnp.maximum(z @ p["w1d"] + p["b1d"], 0.0)
    logits = hd @ p["wout"] + p["bout"]
    return logits, mu, logvar


if __name__ == "__main__":
    # Small shapes consistent with the module: MLP VAE on flattened inputs.
    B, D_IN, HID, LAT = 16, 64, 32, 16

    key = jax.random.PRNGKey(0)
    k_x, k_eps, k_params = jax.random.split(key, 3)

    x = jax.random.uniform(k_x, (B, D_IN), jnp.float32)       # data in [0,1)
    eps = jax.random.normal(k_eps, (B, LAT), jnp.float32)     # reparam noise
    params = init_params(k_params, D_IN, HID, LAT)

    logits, mu_q, logvar_q = mixture_csrae_forward(x, eps, params)
    jax.block_until_ready((logits, mu_q, logvar_q))

    # Sanity check against pure-JAX f32 reference (kernel uses bf16 MXU
    # operands with f32 accumulation -> loosened tolerances).
    ref_logits, ref_mu, ref_logvar = reference_forward(x, eps, params)
    assert logits.shape == (B, D_IN)
    assert mu_q.shape == (B, LAT) and logvar_q.shape == (B, LAT)
    assert jnp.allclose(logits, ref_logits, atol=5e-2, rtol=5e-2)
    assert jnp.allclose(mu_q, ref_mu, atol=5e-2, rtol=5e-2)
    assert jnp.allclose(logvar_q, ref_logvar, atol=5e-2, rtol=5e-2)

    # TODO(synk): loss() (BCE-with-logits + CS-divergence vs. GMM prior) is a
    # training-only scalar reduction path, not part of forward(); not kernelized.

    print("KERNEL_OK")
</pallas_src>

<mosaic_0001>
module attributes {stable_mosaic.version = 11 : i64} {
  func.func @csrae_fwd_kernel(%arg0: i32, %arg1: memref<16x128xbf16, #tpu.memory_space<vmem>>, %arg2: memref<16x128xf32, #tpu.memory_space<vmem>>, %arg3: memref<128x128xbf16, #tpu.memory_space<vmem>>, %arg4: memref<1x128xf32, #tpu.memory_space<vmem>>, %arg5: memref<128x256xbf16, #tpu.memory_space<vmem>>, %arg6: memref<1x256xf32, #tpu.memory_space<vmem>>, %arg7: memref<128x128xbf16, #tpu.memory_space<vmem>>, %arg8: memref<1x128xf32, #tpu.memory_space<vmem>>, %arg9: memref<128x128xbf16, #tpu.memory_space<vmem>>, %arg10: memref<1x128xf32, #tpu.memory_space<vmem>>, %arg11: memref<16x384xf32, #tpu.memory_space<vmem>>) attributes {dimension_semantics = [#tpu.dimension_semantics<parallel>], iteration_bounds = array<i64: 1>, scalar_prefetch = 0 : i64, scratch_operands = 0 : i64, tpu.core_type = #tpu.core_type<tc>, window_params = [{transform_indices = @transform_0, window_bounds = array<i64: 16, 128>}, {transform_indices = @transform_1, window_bounds = array<i64: 16, 128>}, {pipeline_mode = #tpu.pipeline_mode<synchronous>, transform_indices = @transform_2, window_bounds = array<i64: 128, 128>}, {pipeline_mode = #tpu.pipeline_mode<synchronous>, transform_indices = @transform_3, window_bounds = array<i64: 1, 128>}, {pipeline_mode = #tpu.pipeline_mode<synchronous>, transform_indices = @transform_4, window_bounds = array<i64: 128, 256>}, {pipeline_mode = #tpu.pipeline_mode<synchronous>, transform_indices = @transform_5, window_bounds = array<i64: 1, 256>}, {pipeline_mode = #tpu.pipeline_mode<synchronous>, transform_indices = @transform_6, window_bounds = array<i64: 128, 128>}, {pipeline_mode = #tpu.pipeline_mode<synchronous>, transform_indices = @transform_7, window_bounds = array<i64: 1, 128>}, {pipeline_mode = #tpu.pipeline_mode<synchronous>, transform_indices = @transform_8, window_bounds = array<i64: 128, 128>}, {pipeline_mode = #tpu.pipeline_mode<synchronous>, transform_indices = @transform_9, window_bounds = array<i64: 1, 128>}, {transform_indices = @transform_10, window_bounds = array<i64: 16, 384>}]} {
    %c0 = arith.constant 0 : index
    %c0_0 = arith.constant 0 : index
    %0 = vector.load %arg1[%c0, %c0_0] : memref<16x128xbf16, #tpu.memory_space<vmem>>, vector<16x128xbf16>
    %c0_1 = arith.constant 0 : index
    %c0_2 = arith.constant 0 : index
    %1 = vector.load %arg3[%c0_1, %c0_2] : memref<128x128xbf16, #tpu.memory_space<vmem>>, vector<128x128xbf16>
    %cst = arith.constant dense<0.000000e+00> : vector<16x128xf32>
    %2 = tpu.matmul %0, %1, %cst {dimension_numbers = #tpu.dot_dimension_numbers<[1], [0], [0], [1], [0, 0, 1, 1], [], []>} : vector<16x128xbf16>, vector<128x128xbf16>, vector<16x128xf32> -> vector<16x128xf32>
    %c0_3 = arith.constant 0 : index
    %c0_4 = arith.constant 0 : index
    %3 = vector.load %arg4[%c0_3, %c0_4] : memref<1x128xf32, #tpu.memory_space<vmem>>, vector<1x128xf32>
    %4 = vector.broadcast %3 : vector<1x128xf32> to vector<16x128xf32>
    %5 = arith.addf %2, %4 : vector<16x128xf32>
    %cst_5 = arith.constant 0.000000e+00 : f32
    %6 = vector.broadcast %cst_5 : f32 to vector<16x128xf32>
    %7 = arith.maximumf %5, %6 : vector<16x128xf32>
    %8 = arith.truncf %7 : vector<16x128xf32> to vector<16x128xbf16>
    %c0_6 = arith.constant 0 : index
    %c0_7 = arith.constant 0 : index
    %9 = vector.load %arg5[%c0_6, %c0_7] : memref<128x256xbf16, #tpu.memory_space<vmem>>, vector<128x256xbf16>
    %cst_8 = arith.constant dense<0.000000e+00> : vector<16x256xf32>
    %10 = tpu.matmul %8, %9, %cst_8 {dimension_numbers = #tpu.dot_dimension_numbers<[1], [0], [0], [1], [0, 0, 1, 1], [], []>} : vector<16x128xbf16>, vector<128x256xbf16>, vector<16x256xf32> -> vector<16x256xf32>
    %c0_9 = arith.constant 0 : index
    %c0_10 = arith.constant 0 : index
    %11 = vector.load %arg6[%c0_9, %c0_10] : memref<1x256xf32, #tpu.memory_space<vmem>>, vector<1x256xf32>
    %12 = vector.broadcast %11 : vector<1x256xf32> to vector<16x256xf32>
    %13 = arith.addf %10, %12 : vector<16x256xf32>
    %14 = vector.extract_strided_slice %13 {offsets = [0, 0], sizes = [16, 128], strides = [1, 1]} : vector<16x256xf32> to vector<16x128xf32>
    %15 = vector.extract_strided_slice %13 {offsets = [0, 128], sizes = [16, 128], strides = [1, 1]} : vector<16x256xf32> to vector<16x128xf32>
    %c0_11 = arith.constant 0 : index
    %c0_12 = arith.constant 0 : index
    %16 = vector.load %arg2[%c0_11, %c0_12] : memref<16x128xf32, #tpu.memory_space<vmem>>, vector<16x128xf32>
    %cst_13 = arith.constant 5.000000e-01 : f32
    %17 = vector.broadcast %cst_13 : f32 to vector<16x128xf32>
    %18 = arith.mulf %17, %15 : vector<16x128xf32>
    %19 = math.exp %18 : vector<16x128xf32>
    %20 = arith.mulf %16, %19 : vector<16x128xf32>
    %21 = arith.addf %14, %20 : vector<16x128xf32>
    %22 = arith.truncf %21 : vector<16x128xf32> to vector<16x128xbf16>
    %c0_14 = arith.constant 0 : index
    %c0_15 = arith.constant 0 : index
    %23 = vector.load %arg7[%c0_14, %c0_15] : memref<128x128xbf16, #tpu.memory_space<vmem>>, vector<128x128xbf16>
    %cst_16 = arith.constant dense<0.000000e+00> : vector<16x128xf32>
    %24 = tpu.matmul %22, %23, %cst_16 {dimension_numbers = #tpu.dot_dimension_numbers<[1], [0], [0], [1], [0, 0, 1, 1], [], []>} : vector<16x128xbf16>, vector<128x128xbf16>, vector<16x128xf32> -> vector<16x128xf32>
    %c0_17 = arith.constant 0 : index
    %c0_18 = arith.constant 0 : index
    %25 = vector.load %arg8[%c0_17, %c0_18] : memref<1x128xf32, #tpu.memory_space<vmem>>, vector<1x128xf32>
    %26 = vector.broadcast %25 : vector<1x128xf32> to vector<16x128xf32>
    %27 = arith.addf %24, %26 : vector<16x128xf32>
    %cst_19 = arith.constant 0.000000e+00 : f32
    %28 = vector.broadcast %cst_19 : f32 to vector<16x128xf32>
    %29 = arith.maximumf %27, %28 : vector<16x128xf32>
    %30 = arith.truncf %29 : vector<16x128xf32> to vector<16x128xbf16>
    %c0_20 = arith.constant 0 : index
    %c0_21 = arith.constant 0 : index
    %31 = vector.load %arg9[%c0_20, %c0_21] : memref<128x128xbf16, #tpu.memory_space<vmem>>, vector<128x128xbf16>
    %cst_22 = arith.constant dense<0.000000e+00> : vector<16x128xf32>
    %32 = tpu.matmul %30, %31, %cst_22 {dimension_numbers = #tpu.dot_dimension_numbers<[1], [0], [0], [1], [0, 0, 1, 1], [], []>} : vector<16x128xbf16>, vector<128x128xbf16>, vector<16x128xf32> -> vector<16x128xf32>
    %c0_23 = arith.constant 0 : index
    %c0_24 = arith.constant 0 : index
    %33 = vector.load %arg10[%c0_23, %c0_24] : memref<1x128xf32, #tpu.memory_space<vmem>>, vector<1x128xf32>
    %34 = vector.broadcast %33 : vector<1x128xf32> to vector<16x128xf32>
    %35 = arith.addf %32, %34 : vector<16x128xf32>
    %c0_25 = arith.constant 0 : index
    %c0_26 = arith.constant 0 : index
    %36 = vector.load %arg11[%c0_25, %c0_26] : memref<16x384xf32, #tpu.memory_space<vmem>>, vector<16x128xf32>
    tpu.vector_store %arg11[%c0_25, %c0_26], %35 {strides = array<i32>} : memref<16x384xf32, #tpu.memory_space<vmem>>, vector<16x128xf32>,
    %c0_27 = arith.constant 0 : index
    %c128 = arith.constant 128 : index
    %37 = vector.load %arg11[%c0_27, %c128] : memref<16x384xf32, #tpu.memory_space<vmem>>, vector<16x256xf32>
    tpu.vector_store %arg11[%c0_27, %c128], %13 {strides = array<i32>} : memref<16x384xf32, #tpu.memory_space<vmem>>, vector<16x256xf32>,
    return
  }
  func.func @transform_0(%arg0: i32) -> (i32, i32) {
    %c0_i32 = arith.constant 0 : i32
    %c0_i32_0 = arith.constant 0 : i32
    return %arg0, %c0_i32 : i32, i32
  }
  func.func @transform_1(%arg0: i32) -> (i32, i32) {
    %c0_i32 = arith.constant 0 : i32
    %c0_i32_0 = arith.constant 0 : i32
    return %arg0, %c0_i32 : i32, i32
  }
  func.func @transform_2(%arg0: i32) -> (i32, i32) {
    %c0_i32 = arith.constant 0 : i32
    %c0_i32_0 = arith.constant 0 : i32
    %c0_i32_1 = arith.constant 0 : i32
    return %c0_i32, %c0_i32_0 : i32, i32
  }
  func.func @transform_3(%arg0: i32) -> (i32, i32) {
    %c0_i32 = arith.constant 0 : i32
    %c0_i32_0 = arith.constant 0 : i32
    %c0_i32_1 = arith.constant 0 : i32
    return %c0_i32, %c0_i32_0 : i32, i32
  }
  func.func @transform_4(%arg0: i32) -> (i32, i32) {
    %c0_i32 = arith.constant 0 : i32
    %c0_i32_0 = arith.constant 0 : i32
    %c0_i32_1 = arith.constant 0 : i32
    return %c0_i32, %c0_i32_0 : i32, i32
  }
  func.func @transform_5(%arg0: i32) -> (i32, i32) {
    %c0_i32 = arith.constant 0 : i32
    %c0_i32_0 = arith.constant 0 : i32
    %c0_i32_1 = arith.constant 0 : i32
    return %c0_i32, %c0_i32_0 : i32, i32
  }
  func.func @transform_6(%arg0: i32) -> (i32, i32) {
    %c0_i32 = arith.constant 0 : i32
    %c0_i32_0 = arith.constant 0 : i32
    %c0_i32_1 = arith.constant 0 : i32
    return %c0_i32, %c0_i32_0 : i32, i32
  }
  func.func @transform_7(%arg0: i32) -> (i32, i32) {
    %c0_i32 = arith.constant 0 : i32
    %c0_i32_0 = arith.constant 0 : i32
    %c0_i32_1 = arith.constant 0 : i32
    return %c0_i32, %c0_i32_0 : i32, i32
  }
  func.func @transform_8(%arg0: i32) -> (i32, i32) {
    %c0_i32 = arith.constant 0 : i32
    %c0_i32_0 = arith.constant 0 : i32
    %c0_i32_1 = arith.constant 0 : i32
    return %c0_i32, %c0_i32_0 : i32, i32
  }
  func.func @transform_9(%arg0: i32) -> (i32, i32) {
    %c0_i32 = arith.constant 0 : i32
    %c0_i32_0 = arith.constant 0 : i32
    %c0_i32_1 = arith.constant 0 : i32
    return %c0_i32, %c0_i32_0 : i32, i32
  }
  func.func @transform_10(%arg0: i32) -> (i32, i32) {
    %c0_i32 = arith.constant 0 : i32
    %c0_i32_0 = arith.constant 0 : i32
    return %arg0, %c0_i32 : i32, i32
  }
}

module attributes {stable_mosaic.version = 11 : i64} {
  func.func @csrae_fwd_kernel(%arg0: i32, %arg1: memref<16x128xbf16, #tpu.memory_space<vmem>>, %arg2: memref<16x128xf32, #tpu.memory_space<vmem>>, %arg3: memref<128x128xbf16, #tpu.memory_space<vmem>>, %arg4: memref<1x128xf32, #tpu.memory_space<vmem>>, %arg5: memref<128x256xbf16, #tpu.memory_space<vmem>>, %arg6: memref<1x256xf32, #tpu.memory_space<vmem>>, %arg7: memref<128x128xbf16, #tpu.memory_space<vmem>>, %arg8: memref<1x128xf32, #tpu.memory_space<vmem>>, %arg9: memref<128x128xbf16, #tpu.memory_space<vmem>>, %arg10: memref<1x128xf32, #tpu.memory_space<vmem>>, %arg11: memref<16x384xf32, #tpu.memory_space<vmem>>) attributes {dimension_semantics = [#tpu.dimension_semantics<parallel>], iteration_bounds = array<i64: 1>, scalar_prefetch = 0 : i64, scratch_operands = 0 : i64, tpu.core_type = #tpu.core_type<tc>, window_params = [{transform_indices = @transform_0, window_bounds = array<i64: 16, 128>}, {transform_indices = @transform_1, window_bounds = array<i64: 16, 128>}, {pipeline_mode = #tpu.pipeline_mode<synchronous>, transform_indices = @transform_2, window_bounds = array<i64: 128, 128>}, {pipeline_mode = #tpu.pipeline_mode<synchronous>, transform_indices = @transform_3, window_bounds = array<i64: 1, 128>}, {pipeline_mode = #tpu.pipeline_mode<synchronous>, transform_indices = @transform_4, window_bounds = array<i64: 128, 256>}, {pipeline_mode = #tpu.pipeline_mode<synchronous>, transform_indices = @transform_5, window_bounds = array<i64: 1, 256>}, {pipeline_mode = #tpu.pipeline_mode<synchronous>, transform_indices = @transform_6, window_bounds = array<i64: 128, 128>}, {pipeline_mode = #tpu.pipeline_mode<synchronous>, transform_indices = @transform_7, window_bounds = array<i64: 1, 128>}, {pipeline_mode = #tpu.pipeline_mode<synchronous>, transform_indices = @transform_8, window_bounds = array<i64: 128, 128>}, {pipeline_mode = #tpu.pipeline_mode<synchronous>, transform_indices = @transform_9, window_bounds = array<i64: 1, 128>}, {transform_indices = @transform_10, window_bounds = array<i64: 16, 384>}]} {
    %c0 = arith.constant 0 : index
    %c0_0 = arith.constant 0 : index
    %0 = vector.load %arg1[%c0, %c0_0] : memref<16x128xbf16, #tpu.memory_space<vmem>>, vector<16x128xbf16>
    %c0_1 = arith.constant 0 : index
    %c0_2 = arith.constant 0 : index
    %1 = vector.load %arg3[%c0_1, %c0_2] : memref<128x128xbf16, #tpu.memory_space<vmem>>, vector<128x128xbf16>
    %cst = arith.constant dense<0.000000e+00> : vector<16x128xf32>
    %2 = tpu.matmul %0, %1, %cst {dimension_numbers = #tpu.dot_dimension_numbers<[1], [0], [0], [1], [0, 0, 1, 1], [], []>} : vector<16x128xbf16>, vector<128x128xbf16>, vector<16x128xf32> -> vector<16x128xf32>
    %c0_3 = arith.constant 0 : index
    %c0_4 = arith.constant 0 : index
    %3 = vector.load %arg4[%c0_3, %c0_4] : memref<1x128xf32, #tpu.memory_space<vmem>>, vector<1x128xf32>
    %4 = vector.broadcast %3 : vector<1x128xf32> to vector<16x128xf32>
    %5 = arith.addf %2, %4 : vector<16x128xf32>
    %cst_5 = arith.constant 0.000000e+00 : f32
    %6 = vector.broadcast %cst_5 : f32 to vector<16x128xf32>
    %7 = arith.maximumf %5, %6 : vector<16x128xf32>
    %8 = arith.truncf %7 : vector<16x128xf32> to vector<16x128xbf16>
    %c0_6 = arith.constant 0 : index
    %c0_7 = arith.constant 0 : index
    %9 = vector.load %arg5[%c0_6, %c0_7] : memref<128x256xbf16, #tpu.memory_space<vmem>>, vector<128x256xbf16>
    %cst_8 = arith.constant dense<0.000000e+00> : vector<16x256xf32>
    %10 = tpu.matmul %8, %9, %cst_8 {dimension_numbers = #tpu.dot_dimension_numbers<[1], [0], [0], [1], [0, 0, 1, 1], [], []>} : vector<16x128xbf16>, vector<128x256xbf16>, vector<16x256xf32> -> vector<16x256xf32>
    %c0_9 = arith.constant 0 : index
    %c0_10 = arith.constant 0 : index
    %11 = vector.load %arg6[%c0_9, %c0_10] : memref<1x256xf32, #tpu.memory_space<vmem>>, vector<1x256xf32>
    %12 = vector.broadcast %11 : vector<1x256xf32> to vector<16x256xf32>
    %13 = arith.addf %10, %12 : vector<16x256xf32>
    %14 = vector.extract_strided_slice %13 {offsets = [0, 0], sizes = [16, 128], strides = [1, 1]} : vector<16x256xf32> to vector<16x128xf32>
    %15 = vector.extract_strided_slice %13 {offsets = [0, 128], sizes = [16, 128], strides = [1, 1]} : vector<16x256xf32> to vector<16x128xf32>
    %c0_11 = arith.constant 0 : index
    %c0_12 = arith.constant 0 : index
    %16 = vector.load %arg2[%c0_11, %c0_12] : memref<16x128xf32, #tpu.memory_space<vmem>>, vector<16x128xf32>
    %cst_13 = arith.constant 5.000000e-01 : f32
    %17 = vector.broadcast %cst_13 : f32 to vector<16x128xf32>
    %18 = arith.mulf %17, %15 : vector<16x128xf32>
    %19 = math.exp %18 : vector<16x128xf32>
    %20 = arith.mulf %16, %19 : vector<16x128xf32>
    %21 = arith.addf %14, %20 : vector<16x128xf32>
    %22 = arith.truncf %21 : vector<16x128xf32> to vector<16x128xbf16>
    %c0_14 = arith.constant 0 : index
    %c0_15 = arith.constant 0 : index
    %23 = vector.load %arg7[%c0_14, %c0_15] : memref<128x128xbf16, #tpu.memory_space<vmem>>, vector<128x128xbf16>
    %cst_16 = arith.constant dense<0.000000e+00> : vector<16x128xf32>
    %24 = tpu.matmul %22, %23, %cst_16 {dimension_numbers = #tpu.dot_dimension_numbers<[1], [0], [0], [1], [0, 0, 1, 1], [], []>} : vector<16x128xbf16>, vector<128x128xbf16>, vector<16x128xf32> -> vector<16x128xf32>
    %c0_17 = arith.constant 0 : index
    %c0_18 = arith.constant 0 : index
    %25 = vector.load %arg8[%c0_17, %c0_18] : memref<1x128xf32, #tpu.memory_space<vmem>>, vector<1x128xf32>
    %26 = vector.broadcast %25 : vector<1x128xf32> to vector<16x128xf32>
    %27 = arith.addf %24, %26 : vector<16x128xf32>
    %cst_19 = arith.constant 0.000000e+00 : f32
    %28 = vector.broadcast %cst_19 : f32 to vector<16x128xf32>
    %29 = arith.maximumf %27, %28 : vector<16x128xf32>
    %30 = arith.truncf %29 : vector<16x128xf32> to vector<16x128xbf16>
    %c0_20 = arith.constant 0 : index
    %c0_21 = arith.constant 0 : index
    %31 = vector.load %arg9[%c0_20, %c0_21] : memref<128x128xbf16, #tpu.memory_space<vmem>>, vector<128x128xbf16>
    %cst_22 = arith.constant dense<0.000000e+00> : vector<16x128xf32>
    %32 = tpu.matmul %30, %31, %cst_22 {dimension_numbers = #tpu.dot_dimension_numbers<[1], [0], [0], [1], [0, 0, 1, 1], [], []>} : vector<16x128xbf16>, vector<128x128xbf16>, vector<16x128xf32> -> vector<16x128xf32>
    %c0_23 = arith.constant 0 : index
    %c0_24 = arith.constant 0 : index
    %33 = vector.load %arg10[%c0_23, %c0_24] : memref<1x128xf32, #tpu.memory_space<vmem>>, vector<1x128xf32>
    %34 = vector.broadcast %33 : vector<1x128xf32> to vector<16x128xf32>
    %35 = arith.addf %32, %34 : vector<16x128xf32>
    %c0_25 = arith.constant 0 : index
    %c0_26 = arith.constant 0 : index
    %36 = vector.load %arg11[%c0_25, %c0_26] : memref<16x384xf32, #tpu.memory_space<vmem>>, vector<16x128xf32>
    tpu.vector_store %arg11[%c0_25, %c0_26], %35 {strides = array<i32>} : memref<16x384xf32, #tpu.memory_space<vmem>>, vector<16x128xf32>,
    %c0_27 = arith.constant 0 : index
    %c128 = arith.constant 128 : index
    %37 = vector.load %arg11[%c0_27, %c128] : memref<16x384xf32, #tpu.memory_space<vmem>>, vector<16x256xf32>
    tpu.vector_store %arg11[%c0_27, %c128], %13 {strides = array<i32>} : memref<16x384xf32, #tpu.memory_space<vmem>>, vector<16x256xf32>,
    return
  }
  func.func @transform_0(%arg0: i32) -> (i32, i32) {
    %c0_i32 = arith.constant 0 : i32
    %c0_i32_0 = arith.constant 0 : i32
    return %arg0, %c0_i32 : i32, i32
  }
  func.func @transform_1(%arg0: i32) -> (i32, i32) {
    %c0_i32 = arith.constant 0 : i32
    %c0_i32_0 = arith.constant 0 : i32
    return %arg0, %c0_i32 : i32, i32
  }
  func.func @transform_2(%arg0: i32) -> (i32, i32) {
    %c0_i32 = arith.constant 0 : i32
    %c0_i32_0 = arith.constant 0 : i32
    %c0_i32_1 = arith.constant 0 : i32
    return %c0_i32, %c0_i32_0 : i32, i32
  }
  func.func @transform_3(%arg0: i32) -> (i32, i32) {
    %c0_i32 = arith.constant 0 : i32
    %c0_i32_0 = arith.constant 0 : i32
    %c0_i32_1 = arith.constant 0 : i32
    return %c0_i32, %c0_i32_0 : i32, i32
  }
  func.func @transform_4(%arg0: i32) -> (i32, i32) {
    %c0_i32 = arith.constant 0 : i32
    %c0_i32_0 = arith.constant 0 : i32
    %c0_i32_1 = arith.constant 0 : i32
    return %c0_i32, %c0_i32_0 : i32, i32
  }
  func.func @transform_5(%arg0: i32) -> (i32, i32) {
    %c0_i32 = arith.constant 0 : i32
    %c0_i32_0 = arith.constant 0 : i32
    %c0_i32_1 = arith.constant 0 : i32
    return %c0_i32, %c0_i32_0 : i32, i32
  }
  func.func @transform_6(%arg0: i32) -> (i32, i32) {
    %c0_i32 = arith.constant 0 : i32
    %c0_i32_0 = arith.constant 0 : i32
    %c0_i32_1 = arith.constant 0 : i32
    return %c0_i32, %c0_i32_0 : i32, i32
  }
  func.func @transform_7(%arg0: i32) -> (i32, i32) {
    %c0_i32 = arith.constant 0 : i32
    %c0_i32_0 = arith.constant 0 : i32
    %c0_i32_1 = arith.constant 0 : i32
    return %c0_i32, %c0_i32_0 : i32, i32
  }
  func.func @transform_8(%arg0: i32) -> (i32, i32) {
    %c0_i32 = arith.constant 0 : i32
    %c0_i32_0 = arith.constant 0 : i32
    %c0_i32_1 = arith.constant 0 : i32
    return %c0_i32, %c0_i32_0 : i32, i32
  }
  func.func @transform_9(%arg0: i32) -> (i32, i32) {
    %c0_i32 = arith.constant 0 : i32
    %c0_i32_0 = arith.constant 0 : i32
    %c0_i32_1 = arith.constant 0 : i32
    return %c0_i32, %c0_i32_0 : i32, i32
  }
  func.func @transform_10(%arg0: i32) -> (i32, i32) {
    %c0_i32 = arith.constant 0 : i32
    %c0_i32_0 = arith.constant 0 : i32
    return %arg0, %c0_i32 : i32, i32
  }
}

</mosaic_0001>

<llo_original>
// kernel: tpu_custom_call.1
$region0: #{tpu_custom_call.1}
  #allocation0 [shape = 'u32[]', space=smem, size = 0x4, offset = 0x4, fixed_abs, tag = 'smem constant byte address 0x4 - core index']
  #allocation1 [shape = 'u32[144,128]{1,0:T(1,128)}', space=vmem, size = 0x12000, scoped, tag = 'internal scratch']
  %s0 = inlined_call_operand.hbm [shape: bf16[16,128], index: 0, kind: input, shape index: {}]
  %s1 = inlined_call_operand.hbm [shape: f32[16,128], index: 1, kind: input, shape index: {}]
  %s2 = inlined_call_operand.hbm [shape: bf16[128,128], index: 2, kind: input, shape index: {}]
  %s3 = inlined_call_operand.vmem [shape: f32[1,128], index: 3, kind: input, shape index: {}]
  %s4 = inlined_call_operand.hbm [shape: bf16[128,256], index: 4, kind: input, shape index: {}]
  %s5 = inlined_call_operand.vmem [shape: f32[1,256], index: 5, kind: input, shape index: {}]
  %s6 = inlined_call_operand.hbm [shape: bf16[128,128], index: 6, kind: input, shape index: {}]
  %s7 = inlined_call_operand.vmem [shape: f32[1,128], index: 7, kind: input, shape index: {}]
  %s8 = inlined_call_operand.hbm [shape: bf16[128,128], index: 8, kind: input, shape index: {}]
  %s9 = inlined_call_operand.vmem [shape: f32[1,128], index: 9, kind: input, shape index: {}]
  %s10 = inlined_call_operand.hbm [shape: f32[16,384], index: 10, kind: output, shape index: {}]
  %s11 = sld [smem:[#allocation0]]
  $region74: #{tpu_custom_call.1} parent=0
    _
  %s13 = ssub.s32 1, %s11
  %s14 = scalar_select 0, %s13, %s11
  $region1: #{tpu_custom_call.1} parent=0
    #allocation2 [shape = 'u8[4096]{0}', space=vmem, size = 0x1000, scoped, tag = 'input window, operand 0, single buffered']
    #allocation3 [shape = 's32[1]{0}', space=sflag, size = 0x4, scoped, tag = 'scoped memory for tpu_custom_call.1']
    #allocation4 [shape = 's32[1]{0}', space=sflag, size = 0x4, scoped, tag = 'scoped memory for tpu_custom_call.1']
    #allocation5 [shape = 'u8[8192]{0}', space=vmem, size = 0x2000, scoped, tag = 'input window, operand 1, single buffered']
    #allocation6 [shape = 's32[1]{0}', space=sflag, size = 0x4, scoped, tag = 'scoped memory for tpu_custom_call.1']
    #allocation7 [shape = 'u8[32768]{0}', space=vmem, size = 0x8000, scoped, tag = 'input window, operand 2, single buffered']
    #allocation8 [shape = 'u8[65536]{0}', space=vmem, size = 0x10000, scoped, tag = 'input window, operand 4, single buffered']
    #allocation9 [shape = 's32[1]{0}', space=sflag, size = 0x4, scoped, tag = 'scoped memory for tpu_custom_call.1']
    #allocation10 [shape = 'u8[32768]{0}', space=vmem, size = 0x8000, scoped, tag = 'input window, operand 6, single buffered']
    #allocation11 [shape = 'u8[32768]{0}', space=vmem, size = 0x8000, scoped, tag = 'input window, operand 8, single buffered']
    #allocation12 [shape = 's32[1]{0}', space=sflag, size = 0x4, scoped, tag = 'scoped memory for tpu_custom_call.1']
    #allocation13 [shape = 'u8[24576]{0}', space=vmem, size = 0x6000, scoped, tag = 'output window, operand 0, single buffered']
    %15 = vsyncpa [#allocation3], 0
    %16 = vsyncpa [#allocation6], 0
    %17 = vsyncpa [#allocation9], 0
    %18 = vsyncpa [#allocation12], 0
    %19 = vsyncpa [#allocation4], 0
    // Predicated region
    $region2: #{tpu_custom_call.1} parent=1 // pred_check
      _
    $region3: #{tpu_custom_call.1} parent=1 // pred_check_branch
      %21 = sbr.rel (0) target = $region5
    $region4: #{tpu_custom_call.1} parent=1 // pred_region
      %s23 = ssub.s32 128, 128
      %24 = vsyncadd [#allocation3], %s23
      %s25 = sshll.u32 [#allocation2], 4
      %s26 = int_to_ptr.vmem [resolvable:$true] %s25
      %31 = dma.hbm_to_vmem [thread:$0]  %s0, 128, %s26, [#allocation3], 64, 64, 4
    $region5: #{tpu_custom_call.1} parent=1 // pred_fallthru
      _
    // Predicated region
    $region6: #{tpu_custom_call.1} parent=1 // pred_check
      _
    $region7: #{tpu_custom_call.1} parent=1 // pred_check_branch
      %33 = sbr.rel (0) target = $region9
    $region8: #{tpu_custom_call.1} parent=1 // pred_region
      %s35 = ssub.s32 256, 256
      %36 = vsyncadd [#allocation6], %s35
      %s37 = sshll.u32 [#allocation5], 4
      %s38 = int_to_ptr.vmem [resolvable:$true] %s37
      %43 = dma.hbm_to_vmem [thread:$0]  %s1, 256, %s38, [#allocation6], 128, 128, 8
    $region9: #{tpu_custom_call.1} parent=1 // pred_fallthru
      _
    // Predicated region
    $region10: #{tpu_custom_call.1} parent=1 // pred_check
      _
    $region11: #{tpu_custom_call.1} parent=1 // pred_check_branch
      %45 = sbr.rel (0) target = $region13
    $region12: #{tpu_custom_call.1} parent=1 // pred_region
      %s47 = ssub.s32 1024, 1024
      %48 = vsyncadd [#allocation6], %s47
      %s49 = sshll.u32 [#allocation7], 4
      %s50 = int_to_ptr.vmem [resolvable:$true] %s49
      %55 = dma.hbm_to_vmem [thread:$0]  %s2, 1024, %s50, [#allocation6], 64, 64, 4
    $region13: #{tpu_custom_call.1} parent=1 // pred_fallthru
      _
    // Predicated region
    $region14: #{tpu_custom_call.1} parent=1 // pred_check
      _
    $region15: #{tpu_custom_call.1} parent=1 // pred_check_branch
      %57 = sbr.rel (0) target = $region17
    $region16: #{tpu_custom_call.1} parent=1 // pred_region
      _
    $region17: #{tpu_custom_call.1} parent=1 // pred_fallthru
      _
    // Predicated region
    $region18: #{tpu_custom_call.1} parent=1 // pred_check
      _
    $region19: #{tpu_custom_call.1} parent=1 // pred_check_branch
      %59 = sbr.rel (0) target = $region21
    $region20: #{tpu_custom_call.1} parent=1 // pred_region
      %s61 = ssub.s32 2048, 2048
      %62 = vsyncadd [#allocation9], %s61
      %s63 = sshll.u32 [#allocation8], 4
      %s64 = int_to_ptr.vmem [resolvable:$true] %s63
      %69 = dma.hbm_to_vmem [thread:$0]  %s4, 2048, %s64, [#allocation9], 128, 128, 8
    $region21: #{tpu_custom_call.1} parent=1 // pred_fallthru
      _
    // Predicated region
    $region22: #{tpu_custom_call.1} parent=1 // pred_check
      _
    $region23: #{tpu_custom_call.1} parent=1 // pred_check_branch
      %71 = sbr.rel (0) target = $region25
    $region24: #{tpu_custom_call.1} parent=1 // pred_region
      _
    $region25: #{tpu_custom_call.1} parent=1 // pred_fallthru
      _
    // Predicated region
    $region26: #{tpu_custom_call.1} parent=1 // pred_check
      _
    $region27: #{tpu_custom_call.1} parent=1 // pred_check_branch
      %73 = sbr.rel (0) target = $region29
    $region28: #{tpu_custom_call.1} parent=1 // pred_region
      %s75 = ssub.s32 1024, 1024
      %76 = vsyncadd [#allocation9], %s75
      %s77 = sshll.u32 [#allocation10], 4
      %s78 = int_to_ptr.vmem [resolvable:$true] %s77
      %83 = dma.hbm_to_vmem [thread:$0]  %s6, 1024, %s78, [#allocation9], 64, 64, 4
    $region29: #{tpu_custom_call.1} parent=1 // pred_fallthru
      _
    // Predicated region
    $region30: #{tpu_custom_call.1} parent=1 // pred_check
      _
    $region31: #{tpu_custom_call.1} parent=1 // pred_check_branch
      %85 = sbr.rel (0) target = $region33
    $region32: #{tpu_custom_call.1} parent=1 // pred_region
      _
    $region33: #{tpu_custom_call.1} parent=1 // pred_fallthru
      _
    // Predicated region
    $region34: #{tpu_custom_call.1} parent=1 // pred_check
      _
    $region35: #{tpu_custom_call.1} parent=1 // pred_check_branch
      %87 = sbr.rel (0) target = $region37
    $region36: #{tpu_custom_call.1} parent=1 // pred_region
      %s89 = ssub.s32 1024, 1024
      %90 = vsyncadd [#allocation12], %s89
      %s91 = sshll.u32 [#allocation11], 4
      %s92 = int_to_ptr.vmem [resolvable:$true] %s91
      %97 = dma.hbm_to_vmem [thread:$0]  %s8, 1024, %s92, [#allocation12], 64, 64, 4
    $region37: #{tpu_custom_call.1} parent=1 // pred_fallthru
      _
    // Predicated region
    $region38: #{tpu_custom_call.1} parent=1 // pred_check
      _
    $region39: #{tpu_custom_call.1} parent=1 // pred_check_branch
      %99 = sbr.rel (0) target = $region41
    $region40: #{tpu_custom_call.1} parent=1 // pred_region
      _
    $region41: #{tpu_custom_call.1} parent=1 // pred_fallthru
      _
    // Predicated region
    $region42: #{tpu_custom_call.1} parent=1 // pred_check
      _
    $region43: #{tpu_custom_call.1} parent=1 // pred_check_branch
      %101 = sbr.rel (0) target = $region45
    $region44: #{tpu_custom_call.1} parent=1 // pred_region
      %102 = dma.done [#allocation3], 128
    $region45: #{tpu_custom_call.1} parent=1 // pred_fallthru
      _
    // Predicated region
    $region46: #{tpu_custom_call.1} parent=1 // pred_check
      _
    $region47: #{tpu_custom_call.1} parent=1 // pred_check_branch
      %104 = sbr.rel (0) target = $region49
    $region48: #{tpu_custom_call.1} parent=1 // pred_region
      %105 = dma.done [#allocation6], 256
    $region49: #{tpu_custom_call.1} parent=1 // pred_fallthru
      _
    // Predicated region
    $region50: #{tpu_custom_call.1} parent=1 // pred_check
      _
    $region51: #{tpu_custom_call.1} parent=1 // pred_check_branch
      %107 = sbr.rel (0) target = $region53
    $region52: #{tpu_custom_call.1} parent=1 // pred_region
      %108 = dma.done [#allocation6], 1024
    $region53: #{tpu_custom_call.1} parent=1 // pred_fallthru
      _
    // Predicated region
    $region54: #{tpu_custom_call.1} parent=1 // pred_check
      _
    $region55: #{tpu_custom_call.1} parent=1 // pred_check_branch
      %110 = sbr.rel (0) target = $region57
    $region56: #{tpu_custom_call.1} parent=1 // pred_region
      %111 = dma.done [#allocation9], 2048
    $region57: #{tpu_custom_call.1} parent=1 // pred_fallthru
      _
    // Predicated region
    $region58: #{tpu_custom_call.1} parent=1 // pred_check
      _
    $region59: #{tpu_custom_call.1} parent=1 // pred_check_branch
      %113 = sbr.rel (0) target = $region61
    $region60: #{tpu_custom_call.1} parent=1 // pred_region
      %114 = dma.done [#allocation9], 1024
    $region61: #{tpu_custom_call.1} parent=1 // pred_fallthru
      _
    // Predicated region
    $region62: #{tpu_custom_call.1} parent=1 // pred_check
      _
    $region63: #{tpu_custom_call.1} parent=1 // pred_check_branch
      %116 = sbr.rel (0) target = $region65
    $region64: #{tpu_custom_call.1} parent=1 // pred_region
      %117 = dma.done [#allocation12], 1024
    $region65: #{tpu_custom_call.1} parent=1 // pred_fallthru
      _
    %v119 = vld [vmem:[#allocation2] sm:$0xf]
    %v120 = vld [vmem:[#allocation2 + $0x4] sm:$0xf]
    %v121 = vld [vmem:[#allocation7] sm:$0xf]
    %v122 = vld [vmem:[#allocation7 + $0x4] sm:$0xf]
    %v123 = vld [vmem:[#allocation7 + $0x8] sm:$0xf]
    %v124 = vld [vmem:[#allocation7 + $0xc] sm:$0xf]
    %v125 = vld [vmem:[#allocation7 + $0x10] sm:$0xf]
    %v126 = vld [vmem:[#allocation7 + $0x14] sm:$0xf]
    %v127 = vld [vmem:[#allocation7 + $0x18] sm:$0xf]
    %v128 = vld [vmem:[#allocation7 + $0x1c] sm:$0xf]
    %v129 = vld [vmem:[#allocation7 + $0x20] sm:$0xf]
    %v130 = vld [vmem:[#allocation7 + $0x24] sm:$0xf]
    %v131 = vld [vmem:[#allocation7 + $0x28] sm:$0xf]
    %v132 = vld [vmem:[#allocation7 + $0x2c] sm:$0xf]
    %v133 = vld [vmem:[#allocation7 + $0x30] sm:$0xf]
    %v134 = vld [vmem:[#allocation7 + $0x34] sm:$0xf]
    %v135 = vld [vmem:[#allocation7 + $0x38] sm:$0xf]
    %v136 = vld [vmem:[#allocation7 + $0x3c] sm:$0xf]
    %v137 = vld [vmem:[%s3] sm:$0x1]
    %v139 = vlaneseq
    %v140 = vshrl.u32 %v139, 7
    %v141 = vsub.s32 0, %v140
    %v142 = vrot.slane %v137, %v141
    %v146 = vunpack.c.l.b16 %v119
    %v147 = vunpack.c.l.b16 %v120
    %v148 = vpack.c.b16 %v147, %v146
    %v166 = vunpack.c.l.b16 %v121
    %v167 = vunpack.c.l.b16 %v122
    %v168 = vunpack.c.l.b16 %v123
    %v169 = vunpack.c.l.b16 %v124
    %v170 = vunpack.c.l.b16 %v125
    %v171 = vunpack.c.l.b16 %v126
    %v172 = vunpack.c.l.b16 %v127
    %v173 = vunpack.c.l.b16 %v128
    %v174 = vunpack.c.l.b16 %v129
    %v175 = vunpack.c.l.b16 %v130
    %v176 = vunpack.c.l.b16 %v131
    %v177 = vunpack.c.l.b16 %v132
    %v178 = vunpack.c.l.b16 %v133
    %v179 = vunpack.c.l.b16 %v134
    %v180 = vunpack.c.l.b16 %v135
    %v181 = vunpack.c.l.b16 %v136
    %v182 = vpack.c.b16 %v167, %v166
    %v183 = vpack.c.b16 %v169, %v168
    %v184 = vpack.c.b16 %v171, %v170
    %v185 = vpack.c.b16 %v173, %v172
    %v186 = vpack.c.b16 %v175, %v174
    %v187 = vpack.c.b16 %v177, %v176
    %v188 = vpack.c.b16 %v179, %v178
    %v189 = vpack.c.b16 %v181, %v180
    %198 = vmatprep.subr.bf16.mxu0 0
    %199 = vmatpush1.bf16.msra.mxu0 %v182
    %200 = vmatprep.subr.bf16.mxu0 0
    %201 = vmatpush1.bf16.msra.mxu0 %v183
    %202 = vmatprep.subr.bf16.mxu0 0
    %203 = vmatpush1.bf16.msra.mxu0 %v184
    %204 = vmatprep.subr.bf16.mxu0 0
    %205 = vmatpush1.bf16.msra.mxu0 %v185
    %206 = vmatprep.subr.bf16.mxu0 0
    %207 = vmatpush1.bf16.msra.mxu0 %v186
    %208 = vmatprep.subr.bf16.mxu0 0
    %209 = vmatpush1.bf16.msra.mxu0 %v187
    %210 = vmatprep.subr.bf16.mxu0 0
    %211 = vmatpush1.bf16.msra.mxu0 %v188
    %212 = vmatprep.subr.bf16.mxu0 0
    %213 = vmatpush1.bf16.msra.mxu0 %v189
    %214 = vmatprep.subr.bf16.mxu0 0
    %215 = vmatpush1.bf16.msra.mxu0 0
    %216 = vmatprep.subr.bf16.mxu0 0
    %217 = vmatpush1.bf16.msra.mxu0 0
    %218 = vmatprep.subr.bf16.mxu0 0
    %219 = vmatpush1.bf16.msra.mxu0 0
    %220 = vmatprep.subr.bf16.mxu0 0
    %221 = vmatpush1.bf16.msra.mxu0 0
    %222 = vmatprep.subr.bf16.mxu0 0
    %223 = vmatpush1.bf16.msra.mxu0 0
    %224 = vmatprep.subr.bf16.mxu0 0
    %225 = vmatpush1.bf16.msra.mxu0 0
    %226 = vmatprep.subr.bf16.mxu0 0
    %227 = vmatpush1.bf16.msra.mxu0 0
    %228 = vmatprep.subr.bf16.mxu0 0
    %229 = vmatpush1.bf16.msra.mxu0 0
    %230 = vmatprep.mubr.bf16.mxu0 0
    %231 = vmatmul.mubr.bf16.gmra.mrb[0].mxu0 %v148
    %v232 = vpop.f32.mrb[0].mxu0
    %v233 = vadd.f32 %v142, %v232
    %v234 = vpop.f32.mrb[0].mxu0
    %v235 = vpop.f32.mrb[0].mxu0
    %v236 = vadd.f32 %v142, %v235
    %v237 = vpop.f32.mrb[0].mxu0
    %238 = vdwg.mxu0
    %v239 = vmax.f32 %v233, 0.0
    %v240 = vmax.f32 %v236, 0.0
    %v241 = vpack.c.bf16 %v240, %v239
    %v242 = vld [vmem:[#allocation8] sm:$0xff]
    %v243 = vld [vmem:[#allocation8 + $0x8] sm:$0xff]
    %v244 = vld [vmem:[#allocation8 + $0x10] sm:$0xff]
    %v245 = vld [vmem:[#allocation8 + $0x18] sm:$0xff]
    %v246 = vld [vmem:[#allocation8 + $0x20] sm:$0xff]
    %v247 = vld [vmem:[#allocation8 + $0x28] sm:$0xff]
    %v248 = vld [vmem:[#allocation8 + $0x30] sm:$0xff]
    %v249 = vld [vmem:[#allocation8 + $0x38] sm:$0xff]
    %v250 = vld [vmem:[#allocation8 + $0x40] sm:$0xff]
    %v251 = vld [vmem:[#allocation8 + $0x48] sm:$0xff]
    %v252 = vld [vmem:[#allocation8 + $0x50] sm:$0xff]
    %v253 = vld [vmem:[#allocation8 + $0x58] sm:$0xff]
    %v254 = vld [vmem:[#allocation8 + $0x60] sm:$0xff]
    %v255 = vld [vmem:[#allocation8 + $0x68] sm:$0xff]
    %v256 = vld [vmem:[#allocation8 + $0x70] sm:$0xff]
    %v257 = vld [vmem:[#allocation8 + $0x78] sm:$0xff]
    %v258 = vld [vmem:[%s5] sm:$0x3]
    %v260 = vlaneseq
    %v261 = vshrl.u32 %v260, 7
    %v262 = vsub.s32 0, %v261
    %v263 = vrot.slane %v258, %v262
    %v264 = vlaneseq
    %v265 = vshrl.u32 %v264, 7
    %v266 = vsub.s32 1, %v265
    %v267 = vrot.slane %v258, %v266
    %v286 = vunpack.c.l.b16 %v242
    %v287 = vunpack.c.h.b16 %v242
    %v288 = vunpack.c.l.b16 %v243
    %v289 = vunpack.c.h.b16 %v243
    %v290 = vunpack.c.l.b16 %v244
    %v291 = vunpack.c.h.b16 %v244
    %v292 = vunpack.c.l.b16 %v245
    %v293 = vunpack.c.h.b16 %v245
    %v294 = vunpack.c.l.b16 %v246
    %v295 = vunpack.c.h.b16 %v246
    %v296 = vunpack.c.l.b16 %v247
    %v297 = vunpack.c.h.b16 %v247
    %v298 = vunpack.c.l.b16 %v248
    %v299 = vunpack.c.h.b16 %v248
    %v300 = vunpack.c.l.b16 %v249
    %v301 = vunpack.c.h.b16 %v249
    %v302 = vunpack.c.l.b16 %v250
    %v303 = vunpack.c.h.b16 %v250
    %v304 = vunpack.c.l.b16 %v251
    %v305 = vunpack.c.h.b16 %v251
    %v306 = vunpack.c.l.b16 %v252
    %v307 = vunpack.c.h.b16 %v252
    %v308 = vunpack.c.l.b16 %v253
    %v309 = vunpack.c.h.b16 %v253
    %v310 = vunpack.c.l.b16 %v254
    %v311 = vunpack.c.h.b16 %v254
    %v312 = vunpack.c.l.b16 %v255
    %v313 = vunpack.c.h.b16 %v255
    %v314 = vunpack.c.l.b16 %v256
    %v315 = vunpack.c.h.b16 %v256
    %v316 = vunpack.c.l.b16 %v257
    %v317 = vunpack.c.h.b16 %v257
    %v318 = vpack.c.b16 %v288, %v286
    %v319 = vpack.c.b16 %v289, %v287
    %v320 = vpack.c.b16 %v292, %v290
    %v321 = vpack.c.b16 %v293, %v291
    %v322 = vpack.c.b16 %v296, %v294
    %v323 = vpack.c.b16 %v297, %v295
    %v324 = vpack.c.b16 %v300, %v298
    %v325 = vpack.c.b16 %v301, %v299
    %v326 = vpack.c.b16 %v304, %v302
    %v327 = vpack.c.b16 %v305, %v303
    %v328 = vpack.c.b16 %v308, %v306
    %v329 = vpack.c.b16 %v309, %v307
    %v330 = vpack.c.b16 %v312, %v310
    %v331 = vpack.c.b16 %v313, %v311
    %v332 = vpack.c.b16 %v316, %v314
    %v333 = vpack.c.b16 %v317, %v315
    %350 = vmatprep.subr.bf16.mxu0 %v319
    %351 = vmatpush1.bf16.msra.mxu0 %v318
    %352 = vmatprep.subr.bf16.mxu0 %v321
    %353 = vmatpush1.bf16.msra.mxu0 %v320
    %354 = vmatprep.subr.bf16.mxu0 %v323
    %355 = vmatpush1.bf16.msra.mxu0 %v322
    %356 = vmatprep.subr.bf16.mxu0 %v325
    %357 = vmatpush1.bf16.msra.mxu0 %v324
    %358 = vmatprep.subr.bf16.mxu0 %v327
    %359 = vmatpush1.bf16.msra.mxu0 %v326
    %360 = vmatprep.subr.bf16.mxu0 %v329
    %361 = vmatpush1.bf16.msra.mxu0 %v328
    %362 = vmatprep.subr.bf16.mxu0 %v331
    %363 = vmatpush1.bf16.msra.mxu0 %v330
    %364 = vmatprep.subr.bf16.mxu0 %v333
    %365 = vmatpush1.bf16.msra.mxu0 %v332
    %366 = vmatprep.subr.bf16.mxu0 0
    %367 = vmatpush1.bf16.msra.mxu0 0
    %368 = vmatprep.subr.bf16.mxu0 0
    %369 = vmatpush1.bf16.msra.mxu0 0
    %370 = vmatprep.subr.bf16.mxu0 0
    %371 = vmatpush1.bf16.msra.mxu0 0
    %372 = vmatprep.subr.bf16.mxu0 0
    %373 = vmatpush1.bf16.msra.mxu0 0
    %374 = vmatprep.subr.bf16.mxu0 0
    %375 = vmatpush1.bf16.msra.mxu0 0
    %376 = vmatprep.subr.bf16.mxu0 0
    %377 = vmatpush1.bf16.msra.mxu0 0
    %378 = vmatprep.subr.bf16.mxu0 0
    %379 = vmatpush1.bf16.msra.mxu0 0
    %380 = vmatprep.subr.bf16.mxu0 0
    %381 = vmatpush1.bf16.msra.mxu0 0
    %382 = vmatprep.mubr.bf16.mxu0 0
    %383 = vmatmul.mubr.bf16.gmra.mrb[0].mxu0 %v241
    %v384 = vpop.f32.mrb[0].mxu0
    %v385 = vadd.f32 %v263, %v384
    %v386 = vpop.f32.mrb[0].mxu0
    %v387 = vadd.f32 %v267, %v386
    %v388 = vpop.f32.mrb[0].mxu0
    %v389 = vadd.f32 %v263, %v388
    %v390 = vpop.f32.mrb[0].mxu0
    %v391 = vadd.f32 %v267, %v390
    %392 = vdwg.mxu0
    %v393 = vld [vmem:[#allocation5] sm:$0xff]
    %v394 = vld [vmem:[#allocation5 + $0x8] sm:$0xff]
    %v395 = vmul.f32 %v387, 0.5
    %v396 = vmul.f32 %v391, 0.5
    %v397 = vmul.f32 %v395, 1.442695
    %v398 = vpow.pop %v397
    %v399 = vmul.f32 %v396, 1.442695
    %v400 = vpow.pop %v399
    %v401 = vmul.f32 %v393, %v398
    %v402 = vmul.f32 %v394, %v400
    %v403 = vadd.f32 %v385, %v401
    %v404 = vadd.f32 %v389, %v402
    %v405 = vpack.c.bf16 %v404, %v403
    %v406 = vld [vmem:[#allocation10] sm:$0xf]
    %v407 = vld [vmem:[#allocation10 + $0x4] sm:$0xf]
    %v408 = vld [vmem:[#allocation10 + $0x8] sm:$0xf]
    %v409 = vld [vmem:[#allocation10 + $0xc] sm:$0xf]
    %v410 = vld [vmem:[#allocation10 + $0x10] sm:$0xf]
    %v411 = vld [vmem:[#allocation10 + $0x14] sm:$0xf]
    %v412 = vld [vmem:[#allocation10 + $0x18] sm:$0xf]
    %v413 = vld [vmem:[#allocation10 + $0x1c] sm:$0xf]
    %v414 = vld [vmem:[#allocation10 + $0x20] sm:$0xf]
    %v415 = vld [vmem:[#allocation10 + $0x24] sm:$0xf]
    %v416 = vld [vmem:[#allocation10 + $0x28] sm:$0xf]
    %v417 = vld [vmem:[#allocation10 + $0x2c] sm:$0xf]
    %v418 = vld [vmem:[#allocation10 + $0x30] sm:$0xf]
    %v419 = vld [vmem:[#allocation10 + $0x34] sm:$0xf]
    %v420 = vld [vmem:[#allocation10 + $0x38] sm:$0xf]
    %v421 = vld [vmem:[#allocation10 + $0x3c] sm:$0xf]
    %v422 = vld [vmem:[%s7] sm:$0x1]
    %v424 = vlaneseq
    %v425 = vshrl.u32 %v424, 7
    %v426 = vsub.s32 0, %v425
    %v427 = vrot.slane %v422, %v426
    %v445 = vunpack.c.l.b16 %v406
    %v446 = vunpack.c.l.b16 %v407
    %v447 = vunpack.c.l.b16 %v408
    %v448 = vunpack.c.l.b16 %v409
    %v449 = vunpack.c.l.b16 %v410
    %v450 = vunpack.c.l.b16 %v411
    %v451 = vunpack.c.l.b16 %v412
    %v452 = vunpack.c.l.b16 %v413
    %v453 = vunpack.c.l.b16 %v414
    %v454 = vunpack.c.l.b16 %v415
    %v455 = vunpack.c.l.b16 %v416
    %v456 = vunpack.c.l.b16 %v417
    %v457 = vunpack.c.l.b16 %v418
    %v458 = vunpack.c.l.b16 %v419
    %v459 = vunpack.c.l.b16 %v420
    %v460 = vunpack.c.l.b16 %v421
    %v461 = vpack.c.b16 %v446, %v445
    %v462 = vpack.c.b16 %v448, %v447
    %v463 = vpack.c.b16 %v450, %v449
    %v464 = vpack.c.b16 %v452, %v451
    %v465 = vpack.c.b16 %v454, %v453
    %v466 = vpack.c.b16 %v456, %v455
    %v467 = vpack.c.b16 %v458, %v457
    %v468 = vpack.c.b16 %v460, %v459
    %477 = vmatprep.subr.bf16.mxu0 0
    %478 = vmatpush1.bf16.msra.mxu0 %v461
    %479 = vmatprep.subr.bf16.mxu0 0
    %480 = vmatpush1.bf16.msra.mxu0 %v462
    %481 = vmatprep.subr.bf16.mxu0 0
    %482 = vmatpush1.bf16.msra.mxu0 %v463
    %483 = vmatprep.subr.bf16.mxu0 0
    %484 = vmatpush1.bf16.msra.mxu0 %v464
    %485 = vmatprep.subr.bf16.mxu0 0
    %486 = vmatpush1.bf16.msra.mxu0 %v465
    %487 = vmatprep.subr.bf16.mxu0 0
    %488 = vmatpush1.bf16.msra.mxu0 %v466
    %489 = vmatprep.subr.bf16.mxu0 0
    %490 = vmatpush1.bf16.msra.mxu0 %v467
    %491 = vmatprep.subr.bf16.mxu0 0
    %492 = vmatpush1.bf16.msra.mxu0 %v468
    %493 = vmatprep.subr.bf16.mxu0 0
    %494 = vmatpush1.bf16.msra.mxu0 0
    %495 = vmatprep.subr.bf16.mxu0 0
    %496 = vmatpush1.bf16.msra.mxu0 0
    %497 = vmatprep.subr.bf16.mxu0 0
    %498 = vmatpush1.bf16.msra.mxu0 0
    %499 = vmatprep.subr.bf16.mxu0 0
    %500 = vmatpush1.bf16.msra.mxu0 0
    %501 = vmatprep.subr.bf16.mxu0 0
    %502 = vmatpush1.bf16.msra.mxu0 0
    %503 = vmatprep.subr.bf16.mxu0 0
    %504 = vmatpush1.bf16.msra.mxu0 0
    %505 = vmatprep.subr.bf16.mxu0 0
    %506 = vmatpush1.bf16.msra.mxu0 0
    %507 = vmatprep.subr.bf16.mxu0 0
    %508 = vmatpush1.bf16.msra.mxu0 0
    %509 = vmatprep.mubr.bf16.mxu0 0
    %510 = vmatmul.mubr.bf16.gmra.mrb[0].mxu0 %v405
    %v511 = vpop.f32.mrb[0].mxu0
    %v512 = vadd.f32 %v427, %v511
    %v513 = vpop.f32.mrb[0].mxu0
    %v514 = vpop.f32.mrb[0].mxu0
    %v515 = vadd.f32 %v427, %v514
    %v516 = vpop.f32.mrb[0].mxu0
    %517 = vdwg.mxu0
    %v518 = vmax.f32 %v512, 0.0
    %v519 = vmax.f32 %v515, 0.0
    %v520 = vpack.c.bf16 %v519, %v518
    %v521 = vld [vmem:[#allocation11] sm:$0xf]
    %v522 = vld [vmem:[#allocation11 + $0x4] sm:$0xf]
    %v523 = vld [vmem:[#allocation11 + $0x8] sm:$0xf]
    %v524 = vld [vmem:[#allocation11 + $0xc] sm:$0xf]
    %v525 = vld [vmem:[#allocation11 + $0x10] sm:$0xf]
    %v526 = vld [vmem:[#allocation11 + $0x14] sm:$0xf]
    %v527 = vld [vmem:[#allocation11 + $0x18] sm:$0xf]
    %v528 = vld [vmem:[#allocation11 + $0x1c] sm:$0xf]
    %v529 = vld [vmem:[#allocation11 + $0x20] sm:$0xf]
    %v530 = vld [vmem:[#allocation11 + $0x24] sm:$0xf]
    %v531 = vld [vmem:[#allocation11 + $0x28] sm:$0xf]
    %v532 = vld [vmem:[#allocation11 + $0x2c] sm:$0xf]
    %v533 = vld [vmem:[#allocation11 + $0x30] sm:$0xf]
    %v534 = vld [vmem:[#allocation11 + $0x34] sm:$0xf]
    %v535 = vld [vmem:[#allocation11 + $0x38] sm:$0xf]
    %v536 = vld [vmem:[#allocation11 + $0x3c] sm:$0xf]
    %v537 = vld [vmem:[%s9] sm:$0x1]
    %v539 = vlaneseq
    %v540 = vshrl.u32 %v539, 7
    %v541 = vsub.s32 0, %v540
    %v542 = vrot.slane %v537, %v541
    %v560 = vunpack.c.l.b16 %v521
    %v561 = vunpack.c.l.b16 %v522
    %v562 = vunpack.c.l.b16 %v523
    %v563 = vunpack.c.l.b16 %v524
    %v564 = vunpack.c.l.b16 %v525
    %v565 = vunpack.c.l.b16 %v526
    %v566 = vunpack.c.l.b16 %v527
    %v567 = vunpack.c.l.b16 %v528
    %v568 = vunpack.c.l.b16 %v529
    %v569 = vunpack.c.l.b16 %v530
    %v570 = vunpack.c.l.b16 %v531
    %v571 = vunpack.c.l.b16 %v532
    %v572 = vunpack.c.l.b16 %v533
    %v573 = vunpack.c.l.b16 %v534
    %v574 = vunpack.c.l.b16 %v535
    %v575 = vunpack.c.l.b16 %v536
    %v576 = vpack.c.b16 %v561, %v560
    %v577 = vpack.c.b16 %v563, %v562
    %v578 = vpack.c.b16 %v565, %v564
    %v579 = vpack.c.b16 %v567, %v566
    %v580 = vpack.c.b16 %v569, %v568
    %v581 = vpack.c.b16 %v571, %v570
    %v582 = vpack.c.b16 %v573, %v572
    %v583 = vpack.c.b16 %v575, %v574
    %592 = vmatprep.subr.bf16.mxu0 0
    %593 = vmatpush1.bf16.msra.mxu0 %v576
    %594 = vmatprep.subr.bf16.mxu0 0
    %595 = vmatpush1.bf16.msra.mxu0 %v577
    %596 = vmatprep.subr.bf16.mxu0 0
    %597 = vmatpush1.bf16.msra.mxu0 %v578
    %598 = vmatprep.subr.bf16.mxu0 0
    %599 = vmatpush1.bf16.msra.mxu0 %v579
    %600 = vmatprep.subr.bf16.mxu0 0
    %601 = vmatpush1.bf16.msra.mxu0 %v580
    %602 = vmatprep.subr.bf16.mxu0 0
    %603 = vmatpush1.bf16.msra.mxu0 %v581
    %604 = vmatprep.subr.bf16.mxu0 0
    %605 = vmatpush1.bf16.msra.mxu0 %v582
    %606 = vmatprep.subr.bf16.mxu0 0
    %607 = vmatpush1.bf16.msra.mxu0 %v583
    %608 = vmatprep.subr.bf16.mxu0 0
    %609 = vmatpush1.bf16.msra.mxu0 0
    %610 = vmatprep.subr.bf16.mxu0 0
    %611 = vmatpush1.bf16.msra.mxu0 0
    %612 = vmatprep.subr.bf16.mxu0 0
    %613 = vmatpush1.bf16.msra.mxu0 0
    %614 = vmatprep.subr.bf16.mxu0 0
    %615 = vmatpush1.bf16.msra.mxu0 0
    %616 = vmatprep.subr.bf16.mxu0 0
    %617 = vmatpush1.bf16.msra.mxu0 0
    %618 = vmatprep.subr.bf16.mxu0 0
    %619 = vmatpush1.bf16.msra.mxu0 0
    %620 = vmatprep.subr.bf16.mxu0 0
    %621 = vmatpush1.bf16.msra.mxu0 0
    %622 = vmatprep.subr.bf16.mxu0 0
    %623 = vmatpush1.bf16.msra.mxu0 0
    %624 = vmatprep.mubr.bf16.mxu0 0
    %625 = vmatmul.mubr.bf16.gmra.mrb[0].mxu0 %v520
    %v626 = vpop.f32.mrb[0].mxu0
    %v627 = vadd.f32 %v542, %v626
    %v628 = vpop.f32.mrb[0].mxu0
    %v629 = vpop.f32.mrb[0].mxu0
    %v630 = vadd.f32 %v542, %v629
    %v631 = vpop.f32.mrb[0].mxu0
    %632 = vdwg.mxu0
    %633 = vst [vmem:[#allocation13] sm:$0xff] %v627
    %634 = vst [vmem:[#allocation13 + $0x18] sm:$0xff] %v630
    %635 = vst [vmem:[#allocation13 + $0x8] sm:$0xff] %v385
    %636 = vst [vmem:[#allocation13 + $0x10] sm:$0xff] %v387
    %637 = vst [vmem:[#allocation13 + $0x20] sm:$0xff] %v389
    %638 = vst [vmem:[#allocation13 + $0x28] sm:$0xff] %v391
    // Predicated region
    $region66: #{tpu_custom_call.1} parent=1 // pred_check
      _
    $region67: #{tpu_custom_call.1} parent=1 // pred_check_branch
      %640 = sbr.rel (0) target = $region69
    $region68: #{tpu_custom_call.1} parent=1 // pred_region
      %s642 = ssub.s32 768, 768
      %643 = vsyncadd [#allocation4], %s642
      %s644 = sshll.u32 [#allocation13], 4
      %s645 = int_to_ptr.vmem [resolvable:$true] %s644
      %650 = dma.vmem_to_hbm [thread:$0]  %s645, 768, %s10, [#allocation4], 384, 384, 24
    $region69: #{tpu_custom_call.1} parent=1 // pred_fallthru
      _
    // Predicated region
    $region70: #{tpu_custom_call.1} parent=1 // pred_check
      _
    $region71: #{tpu_custom_call.1} parent=1 // pred_check_branch
      %652 = sbr.rel (0) target = $region73
    $region72: #{tpu_custom_call.1} parent=1 // pred_region
      %653 = dma.done [#allocation4], 768
    $region73: #{tpu_custom_call.1} parent=1 // pred_fallthru
      _
    %654 = vsyncpa [#allocation3], 1
    %655 = vsyncpa [#allocation6], 1
    %656 = vsyncpa [#allocation9], 1
    %657 = vsyncpa [#allocation12], 1
    %658 = vsyncpa [#allocation4], 1

// kernel: tpu_custom_call.1
$region0: #{tpu_custom_call.1}
  #allocation0 [shape = 'u32[]', space=smem, size = 0x4, offset = 0x4, fixed_abs, tag = 'smem constant byte address 0x4 - core index']
  #allocation1 [shape = 'u32[144,128]{1,0:T(1,128)}', space=vmem, size = 0x12000, scoped, tag = 'internal scratch']
  %s0 = inlined_call_operand.hbm [shape: bf16[16,128], index: 0, kind: input, shape index: {}]
  %s1 = inlined_call_operand.hbm [shape: f32[16,128], index: 1, kind: input, shape index: {}]
  %s2 = inlined_call_operand.hbm [shape: bf16[128,128], index: 2, kind: input, shape index: {}]
  %s3 = inlined_call_operand.vmem [shape: f32[1,128], index: 3, kind: input, shape index: {}]
  %s4 = inlined_call_operand.hbm [shape: bf16[128,256], index: 4, kind: input, shape index: {}]
  %s5 = inlined_call_operand.vmem [shape: f32[1,256], index: 5, kind: input, shape index: {}]
  %s6 = inlined_call_operand.hbm [shape: bf16[128,128], index: 6, kind: input, shape index: {}]
  %s7 = inlined_call_operand.vmem [shape: f32[1,128], index: 7, kind: input, shape index: {}]
  %s8 = inlined_call_operand.hbm [shape: bf16[128,128], index: 8, kind: input, shape index: {}]
  %s9 = inlined_call_operand.vmem [shape: f32[1,128], index: 9, kind: input, shape index: {}]
  %s10 = inlined_call_operand.hbm [shape: f32[16,384], index: 10, kind: output, shape index: {}]
  %s11 = sld [smem:[#allocation0]]
  $region74: #{tpu_custom_call.1} parent=0
    _
  %s13 = ssub.s32 1, %s11
  %s14 = scalar_select 0, %s13, %s11
  $region1: #{tpu_custom_call.1} parent=0
    #allocation2 [shape = 'u8[4096]{0}', space=vmem, size = 0x1000, scoped, tag = 'input window, operand 0, single buffered']
    #allocation3 [shape = 's32[1]{0}', space=sflag, size = 0x4, scoped, tag = 'scoped memory for tpu_custom_call.1']
    #allocation4 [shape = 's32[1]{0}', space=sflag, size = 0x4, scoped, tag = 'scoped memory for tpu_custom_call.1']
    #allocation5 [shape = 'u8[8192]{0}', space=vmem, size = 0x2000, scoped, tag = 'input window, operand 1, single buffered']
    #allocation6 [shape = 's32[1]{0}', space=sflag, size = 0x4, scoped, tag = 'scoped memory for tpu_custom_call.1']
    #allocation7 [shape = 'u8[32768]{0}', space=vmem, size = 0x8000, scoped, tag = 'input window, operand 2, single buffered']
    #allocation8 [shape = 'u8[65536]{0}', space=vmem, size = 0x10000, scoped, tag = 'input window, operand 4, single buffered']
    #allocation9 [shape = 's32[1]{0}', space=sflag, size = 0x4, scoped, tag = 'scoped memory for tpu_custom_call.1']
    #allocation10 [shape = 'u8[32768]{0}', space=vmem, size = 0x8000, scoped, tag = 'input window, operand 6, single buffered']
    #allocation11 [shape = 'u8[32768]{0}', space=vmem, size = 0x8000, scoped, tag = 'input window, operand 8, single buffered']
    #allocation12 [shape = 's32[1]{0}', space=sflag, size = 0x4, scoped, tag = 'scoped memory for tpu_custom_call.1']
    #allocation13 [shape = 'u8[24576]{0}', space=vmem, size = 0x6000, scoped, tag = 'output window, operand 0, single buffered']
    %15 = vsyncpa [#allocation3], 0
    %16 = vsyncpa [#allocation6], 0
    %17 = vsyncpa [#allocation9], 0
    %18 = vsyncpa [#allocation12], 0
    %19 = vsyncpa [#allocation4], 0
    // Predicated region
    $region2: #{tpu_custom_call.1} parent=1 // pred_check
      _
    $region3: #{tpu_custom_call.1} parent=1 // pred_check_branch
      %21 = sbr.rel (0) target = $region5
    $region4: #{tpu_custom_call.1} parent=1 // pred_region
      %s23 = ssub.s32 128, 128
      %24 = vsyncadd [#allocation3], %s23
      %s25 = sshll.u32 [#allocation2], 4
      %s26 = int_to_ptr.vmem [resolvable:$true] %s25
      %31 = dma.hbm_to_vmem [thread:$0]  %s0, 128, %s26, [#allocation3], 64, 64, 4
    $region5: #{tpu_custom_call.1} parent=1 // pred_fallthru
      _
    // Predicated region
    $region6: #{tpu_custom_call.1} parent=1 // pred_check
      _
    $region7: #{tpu_custom_call.1} parent=1 // pred_check_branch
      %33 = sbr.rel (0) target = $region9
    $region8: #{tpu_custom_call.1} parent=1 // pred_region
      %s35 = ssub.s32 256, 256
      %36 = vsyncadd [#allocation6], %s35
      %s37 = sshll.u32 [#allocation5], 4
      %s38 = int_to_ptr.vmem [resolvable:$true] %s37
      %43 = dma.hbm_to_vmem [thread:$0]  %s1, 256, %s38, [#allocation6], 128, 128, 8
    $region9: #{tpu_custom_call.1} parent=1 // pred_fallthru
      _
    // Predicated region
    $region10: #{tpu_custom_call.1} parent=1 // pred_check
      _
    $region11: #{tpu_custom_call.1} parent=1 // pred_check_branch
      %45 = sbr.rel (0) target = $region13
    $region12: #{tpu_custom_call.1} parent=1 // pred_region
      %s47 = ssub.s32 1024, 1024
      %48 = vsyncadd [#allocation6], %s47
      %s49 = sshll.u32 [#allocation7], 4
      %s50 = int_to_ptr.vmem [resolvable:$true] %s49
      %55 = dma.hbm_to_vmem [thread:$0]  %s2, 1024, %s50, [#allocation6], 64, 64, 4
    $region13: #{tpu_custom_call.1} parent=1 // pred_fallthru
      _
    // Predicated region
    $region14: #{tpu_custom_call.1} parent=1 // pred_check
      _
    $region15: #{tpu_custom_call.1} parent=1 // pred_check_branch
      %57 = sbr.rel (0) target = $region17
    $region16: #{tpu_custom_call.1} parent=1 // pred_region
      _
    $region17: #{tpu_custom_call.1} parent=1 // pred_fallthru
      _
    // Predicated region
    $region18: #{tpu_custom_call.1} parent=1 // pred_check
      _
    $region19: #{tpu_custom_call.1} parent=1 // pred_check_branch
      %59 = sbr.rel (0) target = $region21
    $region20: #{tpu_custom_call.1} parent=1 // pred_region
      %s61 = ssub.s32 2048, 2048
      %62 = vsyncadd [#allocation9], %s61
      %s63 = sshll.u32 [#allocation8], 4
      %s64 = int_to_ptr.vmem [resolvable:$true] %s63
      %69 = dma.hbm_to_vmem [thread:$0]  %s4, 2048, %s64, [#allocation9], 128, 128, 8
    $region21: #{tpu_custom_call.1} parent=1 // pred_fallthru
      _
    // Predicated region
    $region22: #{tpu_custom_call.1} parent=1 // pred_check
      _
    $region23: #{tpu_custom_call.1} parent=1 // pred_check_branch
      %71 = sbr.rel (0) target = $region25
    $region24: #{tpu_custom_call.1} parent=1 // pred_region
      _
    $region25: #{tpu_custom_call.1} parent=1 // pred_fallthru
      _
    // Predicated region
    $region26: #{tpu_custom_call.1} parent=1 // pred_check
      _
    $region27: #{tpu_custom_call.1} parent=1 // pred_check_branch
      %73 = sbr.rel (0) target = $region29
    $region28: #{tpu_custom_call.1} parent=1 // pred_region
      %s75 = ssub.s32 1024, 1024
      %76 = vsyncadd [#allocation9], %s75
      %s77 = sshll.u32 [#allocation10], 4
      %s78 = int_to_ptr.vmem [resolvable:$true] %s77
      %83 = dma.hbm_to_vmem [thread:$0]  %s6, 1024, %s78, [#allocation9], 64, 64, 4
    $region29: #{tpu_custom_call.1} parent=1 // pred_fallthru
      _
    // Predicated region
    $region30: #{tpu_custom_call.1} parent=1 // pred_check
      _
    $region31: #{tpu_custom_call.1} parent=1 // pred_check_branch
      %85 = sbr.rel (0) target = $region33
    $region32: #{tpu_custom_call.1} parent=1 // pred_region
      _
    $region33: #{tpu_custom_call.1} parent=1 // pred_fallthru
      _
    // Predicated region
    $region34: #{tpu_custom_call.1} parent=1 // pred_check
      _
    $region35: #{tpu_custom_call.1} parent=1 // pred_check_branch
      %87 = sbr.rel (0) target = $region37
    $region36: #{tpu_custom_call.1} parent=1 // pred_region
      %s89 = ssub.s32 1024, 1024
      %90 = vsyncadd [#allocation12], %s89
      %s91 = sshll.u32 [#allocation11], 4
      %s92 = int_to_ptr.vmem [resolvable:$true] %s91
      %97 = dma.hbm_to_vmem [thread:$0]  %s8, 1024, %s92, [#allocation12], 64, 64, 4
    $region37: #{tpu_custom_call.1} parent=1 // pred_fallthru
      _
    // Predicated region
    $region38: #{tpu_custom_call.1} parent=1 // pred_check
      _
    $region39: #{tpu_custom_call.1} parent=1 // pred_check_branch
      %99 = sbr.rel (0) target = $region41
    $region40: #{tpu_custom_call.1} parent=1 // pred_region
      _
    $region41: #{tpu_custom_call.1} parent=1 // pred_fallthru
      _
    // Predicated region
    $region42: #{tpu_custom_call.1} parent=1 // pred_check
      _
    $region43: #{tpu_custom_call.1} parent=1 // pred_check_branch
      %101 = sbr.rel (0) target = $region45
    $region44: #{tpu_custom_call.1} parent=1 // pred_region
      %102 = dma.done [#allocation3], 128
    $region45: #{tpu_custom_call.1} parent=1 // pred_fallthru
      _
    // Predicated region
    $region46: #{tpu_custom_call.1} parent=1 // pred_check
      _
    $region47: #{tpu_custom_call.1} parent=1 // pred_check_branch
      %104 = sbr.rel (0) target = $region49
    $region48: #{tpu_custom_call.1} parent=1 // pred_region
      %105 = dma.done [#allocation6], 256
    $region49: #{tpu_custom_call.1} parent=1 // pred_fallthru
      _
    // Predicated region
    $region50: #{tpu_custom_call.1} parent=1 // pred_check
      _
    $region51: #{tpu_custom_call.1} parent=1 // pred_check_branch
      %107 = sbr.rel (0) target = $region53
    $region52: #{tpu_custom_call.1} parent=1 // pred_region
      %108 = dma.done [#allocation6], 1024
    $region53: #{tpu_custom_call.1} parent=1 // pred_fallthru
      _
    // Predicated region
    $region54: #{tpu_custom_call.1} parent=1 // pred_check
      _
    $region55: #{tpu_custom_call.1} parent=1 // pred_check_branch
      %110 = sbr.rel (0) target = $region57
    $region56: #{tpu_custom_call.1} parent=1 // pred_region
      %111 = dma.done [#allocation9], 2048
    $region57: #{tpu_custom_call.1} parent=1 // pred_fallthru
      _
    // Predicated region
    $region58: #{tpu_custom_call.1} parent=1 // pred_check
      _
    $region59: #{tpu_custom_call.1} parent=1 // pred_check_branch
      %113 = sbr.rel (0) target = $region61
    $region60: #{tpu_custom_call.1} parent=1 // pred_region
      %114 = dma.done [#allocation9], 1024
    $region61: #{tpu_custom_call.1} parent=1 // pred_fallthru
      _
    // Predicated region
    $region62: #{tpu_custom_call.1} parent=1 // pred_check
      _
    $region63: #{tpu_custom_call.1} parent=1 // pred_check_branch
      %116 = sbr.rel (0) target = $region65
    $region64: #{tpu_custom_call.1} parent=1 // pred_region
      %117 = dma.done [#allocation12], 1024
    $region65: #{tpu_custom_call.1} parent=1 // pred_fallthru
      _
    %v119 = vld [vmem:[#allocation2] sm:$0xf]
    %v120 = vld [vmem:[#allocation2 + $0x4] sm:$0xf]
    %v121 = vld [vmem:[#allocation7] sm:$0xf]
    %v122 = vld [vmem:[#allocation7 + $0x4] sm:$0xf]
    %v123 = vld [vmem:[#allocation7 + $0x8] sm:$0xf]
    %v124 = vld [vmem:[#allocation7 + $0xc] sm:$0xf]
    %v125 = vld [vmem:[#allocation7 + $0x10] sm:$0xf]
    %v126 = vld [vmem:[#allocation7 + $0x14] sm:$0xf]
    %v127 = vld [vmem:[#allocation7 + $0x18] sm:$0xf]
    %v128 = vld [vmem:[#allocation7 + $0x1c] sm:$0xf]
    %v129 = vld [vmem:[#allocation7 + $0x20] sm:$0xf]
    %v130 = vld [vmem:[#allocation7 + $0x24] sm:$0xf]
    %v131 = vld [vmem:[#allocation7 + $0x28] sm:$0xf]
    %v132 = vld [vmem:[#allocation7 + $0x2c] sm:$0xf]
    %v133 = vld [vmem:[#allocation7 + $0x30] sm:$0xf]
    %v134 = vld [vmem:[#allocation7 + $0x34] sm:$0xf]
    %v135 = vld [vmem:[#allocation7 + $0x38] sm:$0xf]
    %v136 = vld [vmem:[#allocation7 + $0x3c] sm:$0xf]
    %v137 = vld [vmem:[%s3] sm:$0x1]
    %v139 = vlaneseq
    %v140 = vshrl.u32 %v139, 7
    %v141 = vsub.s32 0, %v140
    %v142 = vrot.slane %v137, %v141
    %v146 = vunpack.c.l.b16 %v119
    %v147 = vunpack.c.l.b16 %v120
    %v148 = vpack.c.b16 %v147, %v146
    %v166 = vunpack.c.l.b16 %v121
    %v167 = vunpack.c.l.b16 %v122
    %v168 = vunpack.c.l.b16 %v123
    %v169 = vunpack.c.l.b16 %v124
    %v170 = vunpack.c.l.b16 %v125
    %v171 = vunpack.c.l.b16 %v126
    %v172 = vunpack.c.l.b16 %v127
    %v173 = vunpack.c.l.b16 %v128
    %v174 = vunpack.c.l.b16 %v129
    %v175 = vunpack.c.l.b16 %v130
    %v176 = vunpack.c.l.b16 %v131
    %v177 = vunpack.c.l.b16 %v132
    %v178 = vunpack.c.l.b16 %v133
    %v179 = vunpack.c.l.b16 %v134
    %v180 = vunpack.c.l.b16 %v135
    %v181 = vunpack.c.l.b16 %v136
    %v182 = vpack.c.b16 %v167, %v166
    %v183 = vpack.c.b16 %v169, %v168
    %v184 = vpack.c.b16 %v171, %v170
    %v185 = vpack.c.b16 %v173, %v172
    %v186 = vpack.c.b16 %v175, %v174
    %v187 = vpack.c.b16 %v177, %v176
    %v188 = vpack.c.b16 %v179, %v178
    %v189 = vpack.c.b16 %v181, %v180
    %198 = vmatprep.subr.bf16.mxu0 0
    %199 = vmatpush1.bf16.msra.mxu0 %v182
    %200 = vmatprep.subr.bf16.mxu0 0
    %201 = vmatpush1.bf16.msra.mxu0 %v183
    %202 = vmatprep.subr.bf16.mxu0 0
    %203 = vmatpush1.bf16.msra.mxu0 %v184
    %204 = vmatprep.subr.bf16.mxu0 0
    %205 = vmatpush1.bf16.msra.mxu0 %v185
    %206 = vmatprep.subr.bf16.mxu0 0
    %207 = vmatpush1.bf16.msra.mxu0 %v186
    %208 = vmatprep.subr.bf16.mxu0 0
    %209 = vmatpush1.bf16.msra.mxu0 %v187
    %210 = vmatprep.subr.bf16.mxu0 0
    %211 = vmatpush1.bf16.msra.mxu0 %v188
    %212 = vmatprep.subr.bf16.mxu0 0
    %213 = vmatpush1.bf16.msra.mxu0 %v189
    %214 = vmatprep.subr.bf16.mxu0 0
    %215 = vmatpush1.bf16.msra.mxu0 0
    %216 = vmatprep.subr.bf16.mxu0 0
    %217 = vmatpush1.bf16.msra.mxu0 0
    %218 = vmatprep.subr.bf16.mxu0 0
    %219 = vmatpush1.bf16.msra.mxu0 0
    %220 = vmatprep.subr.bf16.mxu0 0
    %221 = vmatpush1.bf16.msra.mxu0 0
    %222 = vmatprep.subr.bf16.mxu0 0
    %223 = vmatpush1.bf16.msra.mxu0 0
    %224 = vmatprep.subr.bf16.mxu0 0
    %225 = vmatpush1.bf16.msra.mxu0 0
    %226 = vmatprep.subr.bf16.mxu0 0
    %227 = vmatpush1.bf16.msra.mxu0 0
    %228 = vmatprep.subr.bf16.mxu0 0
    %229 = vmatpush1.bf16.msra.mxu0 0
    %230 = vmatprep.mubr.bf16.mxu0 0
    %231 = vmatmul.mubr.bf16.gmra.mrb[0].mxu0 %v148
    %v232 = vpop.f32.mrb[0].mxu0
    %v233 = vadd.f32 %v142, %v232
    %v234 = vpop.f32.mrb[0].mxu0
    %v235 = vpop.f32.mrb[0].mxu0
    %v236 = vadd.f32 %v142, %v235
    %v237 = vpop.f32.mrb[0].mxu0
    %238 = vdwg.mxu0
    %v239 = vmax.f32 %v233, 0.0
    %v240 = vmax.f32 %v236, 0.0
    %v241 = vpack.c.bf16 %v240, %v239
    %v242 = vld [vmem:[#allocation8] sm:$0xff]
    %v243 = vld [vmem:[#allocation8 + $0x8] sm:$0xff]
    %v244 = vld [vmem:[#allocation8 + $0x10] sm:$0xff]
    %v245 = vld [vmem:[#allocation8 + $0x18] sm:$0xff]
    %v246 = vld [vmem:[#allocation8 + $0x20] sm:$0xff]
    %v247 = vld [vmem:[#allocation8 + $0x28] sm:$0xff]
    %v248 = vld [vmem:[#allocation8 + $0x30] sm:$0xff]
    %v249 = vld [vmem:[#allocation8 + $0x38] sm:$0xff]
    %v250 = vld [vmem:[#allocation8 + $0x40] sm:$0xff]
    %v251 = vld [vmem:[#allocation8 + $0x48] sm:$0xff]
    %v252 = vld [vmem:[#allocation8 + $0x50] sm:$0xff]
    %v253 = vld [vmem:[#allocation8 + $0x58] sm:$0xff]
    %v254 = vld [vmem:[#allocation8 + $0x60] sm:$0xff]
    %v255 = vld [vmem:[#allocation8 + $0x68] sm:$0xff]
    %v256 = vld [vmem:[#allocation8 + $0x70] sm:$0xff]
    %v257 = vld [vmem:[#allocation8 + $0x78] sm:$0xff]
    %v258 = vld [vmem:[%s5] sm:$0x3]
    %v260 = vlaneseq
    %v261 = vshrl.u32 %v260, 7
    %v262 = vsub.s32 0, %v261
    %v263 = vrot.slane %v258, %v262
    %v264 = vlaneseq
    %v265 = vshrl.u32 %v264, 7
    %v266 = vsub.s32 1, %v265
    %v267 = vrot.slane %v258, %v266
    %v286 = vunpack.c.l.b16 %v242
    %v287 = vunpack.c.h.b16 %v242
    %v288 = vunpack.c.l.b16 %v243
    %v289 = vunpack.c.h.b16 %v243
    %v290 = vunpack.c.l.b16 %v244
    %v291 = vunpack.c.h.b16 %v244
    %v292 = vunpack.c.l.b16 %v245
    %v293 = vunpack.c.h.b16 %v245
    %v294 = vunpack.c.l.b16 %v246
    %v295 = vunpack.c.h.b16 %v246
    %v296 = vunpack.c.l.b16 %v247
    %v297 = vunpack.c.h.b16 %v247
    %v298 = vunpack.c.l.b16 %v248
    %v299 = vunpack.c.h.b16 %v248
    %v300 = vunpack.c.l.b16 %v249
    %v301 = vunpack.c.h.b16 %v249
    %v302 = vunpack.c.l.b16 %v250
    %v303 = vunpack.c.h.b16 %v250
    %v304 = vunpack.c.l.b16 %v251
    %v305 = vunpack.c.h.b16 %v251
    %v306 = vunpack.c.l.b16 %v252
    %v307 = vunpack.c.h.b16 %v252
    %v308 = vunpack.c.l.b16 %v253
    %v309 = vunpack.c.h.b16 %v253
    %v310 = vunpack.c.l.b16 %v254
    %v311 = vunpack.c.h.b16 %v254
    %v312 = vunpack.c.l.b16 %v255
    %v313 = vunpack.c.h.b16 %v255
    %v314 = vunpack.c.l.b16 %v256
    %v315 = vunpack.c.h.b16 %v256
    %v316 = vunpack.c.l.b16 %v257
    %v317 = vunpack.c.h.b16 %v257
    %v318 = vpack.c.b16 %v288, %v286
    %v319 = vpack.c.b16 %v289, %v287
    %v320 = vpack.c.b16 %v292, %v290
    %v321 = vpack.c.b16 %v293, %v291
    %v322 = vpack.c.b16 %v296, %v294
    %v323 = vpack.c.b16 %v297, %v295
    %v324 = vpack.c.b16 %v300, %v298
    %v325 = vpack.c.b16 %v301, %v299
    %v326 = vpack.c.b16 %v304, %v302
    %v327 = vpack.c.b16 %v305, %v303
    %v328 = vpack.c.b16 %v308, %v306
    %v329 = vpack.c.b16 %v309, %v307
    %v330 = vpack.c.b16 %v312, %v310
    %v331 = vpack.c.b16 %v313, %v311
    %v332 = vpack.c.b16 %v316, %v314
    %v333 = vpack.c.b16 %v317, %v315
    %350 = vmatprep.subr.bf16.mxu0 %v319
    %351 = vmatpush1.bf16.msra.mxu0 %v318
    %352 = vmatprep.subr.bf16.mxu0 %v321
    %353 = vmatpush1.bf16.msra.mxu0 %v320
    %354 = vmatprep.subr.bf16.mxu0 %v323
    %355 = vmatpush1.bf16.msra.mxu0 %v322
    %356 = vmatprep.subr.bf16.mxu0 %v325
    %357 = vmatpush1.bf16.msra.mxu0 %v324
    %358 = vmatprep.subr.bf16.mxu0 %v327
    %359 = vmatpush1.bf16.msra.mxu0 %v326
    %360 = vmatprep.subr.bf16.mxu0 %v329
    %361 = vmatpush1.bf16.msra.mxu0 %v328
    %362 = vmatprep.subr.bf16.mxu0 %v331
    %363 = vmatpush1.bf16.msra.mxu0 %v330
    %364 = vmatprep.subr.bf16.mxu0 %v333
    %365 = vmatpush1.bf16.msra.mxu0 %v332
    %366 = vmatprep.subr.bf16.mxu0 0
    %367 = vmatpush1.bf16.msra.mxu0 0
    %368 = vmatprep.subr.bf16.mxu0 0
    %369 = vmatpush1.bf16.msra.mxu0 0
    %370 = vmatprep.subr.bf16.mxu0 0
    %371 = vmatpush1.bf16.msra.mxu0 0
    %372 = vmatprep.subr.bf16.mxu0 0
    %373 = vmatpush1.bf16.msra.mxu0 0
    %374 = vmatprep.subr.bf16.mxu0 0
    %375 = vmatpush1.bf16.msra.mxu0 0
    %376 = vmatprep.subr.bf16.mxu0 0
    %377 = vmatpush1.bf16.msra.mxu0 0
    %378 = vmatprep.subr.bf16.mxu0 0
    %379 = vmatpush1.bf16.msra.mxu0 0
    %380 = vmatprep.subr.bf16.mxu0 0
    %381 = vmatpush1.bf16.msra.mxu0 0
    %382 = vmatprep.mubr.bf16.mxu0 0
    %383 = vmatmul.mubr.bf16.gmra.mrb[0].mxu0 %v241
    %v384 = vpop.f32.mrb[0].mxu0
    %v385 = vadd.f32 %v263, %v384
    %v386 = vpop.f32.mrb[0].mxu0
    %v387 = vadd.f32 %v267, %v386
    %v388 = vpop.f32.mrb[0].mxu0
    %v389 = vadd.f32 %v263, %v388
    %v390 = vpop.f32.mrb[0].mxu0
    %v391 = vadd.f32 %v267, %v390
    %392 = vdwg.mxu0
    %v393 = vld [vmem:[#allocation5] sm:$0xff]
    %v394 = vld [vmem:[#allocation5 + $0x8] sm:$0xff]
    %v395 = vmul.f32 %v387, 0.5
    %v396 = vmul.f32 %v391, 0.5
    %v397 = vmul.f32 %v395, 1.442695
    %v398 = vpow.pop %v397
    %v399 = vmul.f32 %v396, 1.442695
    %v400 = vpow.pop %v399
    %v401 = vmul.f32 %v393, %v398
    %v402 = vmul.f32 %v394, %v400
    %v403 = vadd.f32 %v385, %v401
    %v404 = vadd.f32 %v389, %v402
    %v405 = vpack.c.bf16 %v404, %v403
    %v406 = vld [vmem:[#allocation10] sm:$0xf]
    %v407 = vld [vmem:[#allocation10 + $0x4] sm:$0xf]
    %v408 = vld [vmem:[#allocation10 + $0x8] sm:$0xf]
    %v409 = vld [vmem:[#allocation10 + $0xc] sm:$0xf]
    %v410 = vld [vmem:[#allocation10 + $0x10] sm:$0xf]
    %v411 = vld [vmem:[#allocation10 + $0x14] sm:$0xf]
    %v412 = vld [vmem:[#allocation10 + $0x18] sm:$0xf]
    %v413 = vld [vmem:[#allocation10 + $0x1c] sm:$0xf]
    %v414 = vld [vmem:[#allocation10 + $0x20] sm:$0xf]
    %v415 = vld [vmem:[#allocation10 + $0x24] sm:$0xf]
    %v416 = vld [vmem:[#allocation10 + $0x28] sm:$0xf]
    %v417 = vld [vmem:[#allocation10 + $0x2c] sm:$0xf]
    %v418 = vld [vmem:[#allocation10 + $0x30] sm:$0xf]
    %v419 = vld [vmem:[#allocation10 + $0x34] sm:$0xf]
    %v420 = vld [vmem:[#allocation10 + $0x38] sm:$0xf]
    %v421 = vld [vmem:[#allocation10 + $0x3c] sm:$0xf]
    %v422 = vld [vmem:[%s7] sm:$0x1]
    %v424 = vlaneseq
    %v425 = vshrl.u32 %v424, 7
    %v426 = vsub.s32 0, %v425
    %v427 = vrot.slane %v422, %v426
    %v445 = vunpack.c.l.b16 %v406
    %v446 = vunpack.c.l.b16 %v407
    %v447 = vunpack.c.l.b16 %v408
    %v448 = vunpack.c.l.b16 %v409
    %v449 = vunpack.c.l.b16 %v410
    %v450 = vunpack.c.l.b16 %v411
    %v451 = vunpack.c.l.b16 %v412
    %v452 = vunpack.c.l.b16 %v413
    %v453 = vunpack.c.l.b16 %v414
    %v454 = vunpack.c.l.b16 %v415
    %v455 = vunpack.c.l.b16 %v416
    %v456 = vunpack.c.l.b16 %v417
    %v457 = vunpack.c.l.b16 %v418
    %v458 = vunpack.c.l.b16 %v419
    %v459 = vunpack.c.l.b16 %v420
    %v460 = vunpack.c.l.b16 %v421
    %v461 = vpack.c.b16 %v446, %v445
    %v462 = vpack.c.b16 %v448, %v447
    %v463 = vpack.c.b16 %v450, %v449
    %v464 = vpack.c.b16 %v452, %v451
    %v465 = vpack.c.b16 %v454, %v453
    %v466 = vpack.c.b16 %v456, %v455
    %v467 = vpack.c.b16 %v458, %v457
    %v468 = vpack.c.b16 %v460, %v459
    %477 = vmatprep.subr.bf16.mxu0 0
    %478 = vmatpush1.bf16.msra.mxu0 %v461
    %479 = vmatprep.subr.bf16.mxu0 0
    %480 = vmatpush1.bf16.msra.mxu0 %v462
    %481 = vmatprep.subr.bf16.mxu0 0
    %482 = vmatpush1.bf16.msra.mxu0 %v463
    %483 = vmatprep.subr.bf16.mxu0 0
    %484 = vmatpush1.bf16.msra.mxu0 %v464
    %485 = vmatprep.subr.bf16.mxu0 0
    %486 = vmatpush1.bf16.msra.mxu0 %v465
    %487 = vmatprep.subr.bf16.mxu0 0
    %488 = vmatpush1.bf16.msra.mxu0 %v466
    %489 = vmatprep.subr.bf16.mxu0 0
    %490 = vmatpush1.bf16.msra.mxu0 %v467
    %491 = vmatprep.subr.bf16.mxu0 0
    %492 = vmatpush1.bf16.msra.mxu0 %v468
    %493 = vmatprep.subr.bf16.mxu0 0
    %494 = vmatpush1.bf16.msra.mxu0 0
    %495 = vmatprep.subr.bf16.mxu0 0
    %496 = vmatpush1.bf16.msra.mxu0 0
    %497 = vmatprep.subr.bf16.mxu0 0
    %498 = vmatpush1.bf16.msra.mxu0 0
    %499 = vmatprep.subr.bf16.mxu0 0
    %500 = vmatpush1.bf16.msra.mxu0 0
    %501 = vmatprep.subr.bf16.mxu0 0
    %502 = vmatpush1.bf16.msra.mxu0 0
    %503 = vmatprep.subr.bf16.mxu0 0
    %504 = vmatpush1.bf16.msra.mxu0 0
    %505 = vmatprep.subr.bf16.mxu0 0
    %506 = vmatpush1.bf16.msra.mxu0 0
    %507 = vmatprep.subr.bf16.mxu0 0
    %508 = vmatpush1.bf16.msra.mxu0 0
    %509 = vmatprep.mubr.bf16.mxu0 0
    %510 = vmatmul.mubr.bf16.gmra.mrb[0].mxu0 %v405
    %v511 = vpop.f32.mrb[0].mxu0
    %v512 = vadd.f32 %v427, %v511
    %v513 = vpop.f32.mrb[0].mxu0
    %v514 = vpop.f32.mrb[0].mxu0
    %v515 = vadd.f32 %v427, %v514
    %v516 = vpop.f32.mrb[0].mxu0
    %517 = vdwg.mxu0
    %v518 = vmax.f32 %v512, 0.0
    %v519 = vmax.f32 %v515, 0.0
    %v520 = vpack.c.bf16 %v519, %v518
    %v521 = vld [vmem:[#allocation11] sm:$0xf]
    %v522 = vld [vmem:[#allocation11 + $0x4] sm:$0xf]
    %v523 = vld [vmem:[#allocation11 + $0x8] sm:$0xf]
    %v524 = vld [vmem:[#allocation11 + $0xc] sm:$0xf]
    %v525 = vld [vmem:[#allocation11 + $0x10] sm:$0xf]
    %v526 = vld [vmem:[#allocation11 + $0x14] sm:$0xf]
    %v527 = vld [vmem:[#allocation11 + $0x18] sm:$0xf]
    %v528 = vld [vmem:[#allocation11 + $0x1c] sm:$0xf]
    %v529 = vld [vmem:[#allocation11 + $0x20] sm:$0xf]
    %v530 = vld [vmem:[#allocation11 + $0x24] sm:$0xf]
    %v531 = vld [vmem:[#allocation11 + $0x28] sm:$0xf]
    %v532 = vld [vmem:[#allocation11 + $0x2c] sm:$0xf]
    %v533 = vld [vmem:[#allocation11 + $0x30] sm:$0xf]
    %v534 = vld [vmem:[#allocation11 + $0x34] sm:$0xf]
    %v535 = vld [vmem:[#allocation11 + $0x38] sm:$0xf]
    %v536 = vld [vmem:[#allocation11 + $0x3c] sm:$0xf]
    %v537 = vld [vmem:[%s9] sm:$0x1]
    %v539 = vlaneseq
    %v540 = vshrl.u32 %v539, 7
    %v541 = vsub.s32 0, %v540
    %v542 = vrot.slane %v537, %v541
    %v560 = vunpack.c.l.b16 %v521
    %v561 = vunpack.c.l.b16 %v522
    %v562 = vunpack.c.l.b16 %v523
    %v563 = vunpack.c.l.b16 %v524
    %v564 = vunpack.c.l.b16 %v525
    %v565 = vunpack.c.l.b16 %v526
    %v566 = vunpack.c.l.b16 %v527
    %v567 = vunpack.c.l.b16 %v528
    %v568 = vunpack.c.l.b16 %v529
    %v569 = vunpack.c.l.b16 %v530
    %v570 = vunpack.c.l.b16 %v531
    %v571 = vunpack.c.l.b16 %v532
    %v572 = vunpack.c.l.b16 %v533
    %v573 = vunpack.c.l.b16 %v534
    %v574 = vunpack.c.l.b16 %v535
    %v575 = vunpack.c.l.b16 %v536
    %v576 = vpack.c.b16 %v561, %v560
    %v577 = vpack.c.b16 %v563, %v562
    %v578 = vpack.c.b16 %v565, %v564
    %v579 = vpack.c.b16 %v567, %v566
    %v580 = vpack.c.b16 %v569, %v568
    %v581 = vpack.c.b16 %v571, %v570
    %v582 = vpack.c.b16 %v573, %v572
    %v583 = vpack.c.b16 %v575, %v574
    %592 = vmatprep.subr.bf16.mxu0 0
    %593 = vmatpush1.bf16.msra.mxu0 %v576
    %594 = vmatprep.subr.bf16.mxu0 0
    %595 = vmatpush1.bf16.msra.mxu0 %v577
    %596 = vmatprep.subr.bf16.mxu0 0
    %597 = vmatpush1.bf16.msra.mxu0 %v578
    %598 = vmatprep.subr.bf16.mxu0 0
    %599 = vmatpush1.bf16.msra.mxu0 %v579
    %600 = vmatprep.subr.bf16.mxu0 0
    %601 = vmatpush1.bf16.msra.mxu0 %v580
    %602 = vmatprep.subr.bf16.mxu0 0
    %603 = vmatpush1.bf16.msra.mxu0 %v581
    %604 = vmatprep.subr.bf16.mxu0 0
    %605 = vmatpush1.bf16.msra.mxu0 %v582
    %606 = vmatprep.subr.bf16.mxu0 0
    %607 = vmatpush1.bf16.msra.mxu0 %v583
    %608 = vmatprep.subr.bf16.mxu0 0
    %609 = vmatpush1.bf16.msra.mxu0 0
    %610 = vmatprep.subr.bf16.mxu0 0
    %611 = vmatpush1.bf16.msra.mxu0 0
    %612 = vmatprep.subr.bf16.mxu0 0
    %613 = vmatpush1.bf16.msra.mxu0 0
    %614 = vmatprep.subr.bf16.mxu0 0
    %615 = vmatpush1.bf16.msra.mxu0 0
    %616 = vmatprep.subr.bf16.mxu0 0
    %617 = vmatpush1.bf16.msra.mxu0 0
    %618 = vmatprep.subr.bf16.mxu0 0
    %619 = vmatpush1.bf16.msra.mxu0 0
    %620 = vmatprep.subr.bf16.mxu0 0
    %621 = vmatpush1.bf16.msra.mxu0 0
    %622 = vmatprep.subr.bf16.mxu0 0
    %623 = vmatpush1.bf16.msra.mxu0 0
    %624 = vmatprep.mubr.bf16.mxu0 0
    %625 = vmatmul.mubr.bf16.gmra.mrb[0].mxu0 %v520
    %v626 = vpop.f32.mrb[0].mxu0
    %v627 = vadd.f32 %v542, %v626
    %v628 = vpop.f32.mrb[0].mxu0
    %v629 = vpop.f32.mrb[0].mxu0
    %v630 = vadd.f32 %v542, %v629
    %v631 = vpop.f32.mrb[0].mxu0
    %632 = vdwg.mxu0
    %633 = vst [vmem:[#allocation13] sm:$0xff] %v627
    %634 = vst [vmem:[#allocation13 + $0x18] sm:$0xff] %v630
    %635 = vst [vmem:[#allocation13 + $0x8] sm:$0xff] %v385
    %636 = vst [vmem:[#allocation13 + $0x10] sm:$0xff] %v387
    %637 = vst [vmem:[#allocation13 + $0x20] sm:$0xff] %v389
    %638 = vst [vmem:[#allocation13 + $0x28] sm:$0xff] %v391
    // Predicated region
    $region66: #{tpu_custom_call.1} parent=1 // pred_check
      _
    $region67: #{tpu_custom_call.1} parent=1 // pred_check_branch
      %640 = sbr.rel (0) target = $region69
    $region68: #{tpu_custom_call.1} parent=1 // pred_region
      %s642 = ssub.s32 768, 768
      %643 = vsyncadd [#allocation4], %s642
      %s644 = sshll.u32 [#allocation13], 4
      %s645 = int_to_ptr.vmem [resolvable:$true] %s644
      %650 = dma.vmem_to_hbm [thread:$0]  %s645, 768, %s10, [#allocation4], 384, 384, 24
    $region69: #{tpu_custom_call.1} parent=1 // pred_fallthru
      _
    // Predicated region
    $region70: #{tpu_custom_call.1} parent=1 // pred_check
      _
    $region71: #{tpu_custom_call.1} parent=1 // pred_check_branch
      %652 = sbr.rel (0) target = $region73
    $region72: #{tpu_custom_call.1} parent=1 // pred_region
      %653 = dma.done [#allocation4], 768
    $region73: #{tpu_custom_call.1} parent=1 // pred_fallthru
      _
    %654 = vsyncpa [#allocation3], 1
    %655 = vsyncpa [#allocation6], 1
    %656 = vsyncpa [#allocation9], 1
    %657 = vsyncpa [#allocation12], 1
    %658 = vsyncpa [#allocation4], 1

</llo_original>
